<compile_context>
chip_gen: v5e
topology: v5e:2x2
jax: 0.10.0
libtpu: 0.0.40
codegen_flags: <defaults>
</compile_context>

<pallas_src>
import jax
import jax.numpy as jnp
from jax.experimental import pallas as pl
from jax.experimental.pallas import tpu as pltpu


LANE = 128


def _round_up(x, m):
    return (x + m - 1) // m * m


def _pad_to(a, shape):
    pads = [(0, t - s) for s, t in zip(a.shape, shape)]
    return jnp.pad(a, pads)


def _const_index_map(ndim):
    return lambda b: (0,) * ndim


def make_wavenet_kernel(dilations, output_width, c_dil_p):
    dilations = tuple(int(d) for d in dilations)

    def kernel(x_ref, w_start_ref, wfg_ref, bfg_ref, wr_ref, br_ref,
               ws_ref, bs_ref, we1_ref, be1_ref, we2_ref, be2_ref, out_ref):
        x = x_ref[0]                         # (L_in, c_in_p) bf16
        l_in = x.shape[0]
        L = l_in - 1                         # start_conv: k=2, no pad, no bias

        # --- start conv: matmul full x for both taps, shift-add the outputs ---
        y0 = jnp.dot(x, w_start_ref[0], preferred_element_type=jnp.float32)
        y1 = jnp.dot(x, w_start_ref[1], preferred_element_type=jnp.float32)
        cur = y0[:L, :] + y1[1:, :]          # (L, c_res_p) f32

        c_skip_p = bs_ref.shape[1]
        skip_sum = jnp.zeros((output_width, c_skip_p), jnp.float32)

        for li, d in enumerate(dilations):
            cur_bf = cur.astype(jnp.bfloat16)

            # Fused gated conv: [f|g] via packed weights, k=2 dilated conv with
            # left zero-pad of `d`:
            #   out[t] = W0 @ cur[t-d] (t >= d, else 0) + W1 @ cur[t] + b
            fg = jnp.dot(cur_bf, wfg_ref[li, 1],
                         preferred_element_type=jnp.float32)
            fg = fg + bfg_ref[li:li + 1, :]                      # (L, 2*c_dil_p)
            tail = jnp.dot(cur_bf[:L - d, :], wfg_ref[li, 0],
                           preferred_element_type=jnp.float32)   # rows d..L-1
            fg = jnp.concatenate([fg[:d, :], fg[d:, :] + tail], axis=0)

            f = fg[:, :c_dil_p]
            g = fg[:, c_dil_p:]
            z = (jnp.tanh(f) * jax.nn.sigmoid(g)).astype(jnp.bfloat16)

            # conv_skip only on the last output_width timesteps (narrow before matmul)
            skip = jnp.dot(z[L - output_width:, :], ws_ref[li],
                           preferred_element_type=jnp.float32) + bs_ref[li:li + 1, :]
            skip_sum = skip_sum + skip

            # conv_residual (1x1) + residual add
            res = jnp.dot(z, wr_ref[li],
                          preferred_element_type=jnp.float32) + br_ref[li:li + 1, :]
            cur = cur + res

        # end_conv_1 -> LeakyReLU -> end_conv_2 -> LeakyReLU
        e1 = jnp.dot(skip_sum.astype(jnp.bfloat16), we1_ref[...],
                     preferred_element_type=jnp.float32) + be1_ref[...]
        e1 = jnp.where(e1 > 0, e1, 0.01 * e1)
        e2 = jnp.dot(e1.astype(jnp.bfloat16), we2_ref[...],
                     preferred_element_type=jnp.float32) + be2_ref[...]
        e2 = jnp.where(e2 > 0, e2, 0.01 * e2)

        out_ref[...] = e2[None]              # (1, output_width, c_out_p)

    return kernel


def wavenet_forward(x_ncl, params, dilations, output_width):
    dilations = tuple(int(d) for d in dilations)
    n, c_in, l_in = x_ncl.shape
    L = l_in - 1
    assert max(dilations) < L, "largest dilation must be < L_in - 1"
    assert output_width <= L, "output_width must be <= L_in - 1"

    n_layers = len(dilations)
    c_res = params["wr"].shape[2]
    c_dil = params["wf"].shape[3]
    c_skip = params["ws"].shape[2]
    c_end = params["w_end1"].shape[1]
    c_out = params["w_end2"].shape[1]

    c_in_p = _round_up(c_in, LANE)
    c_res_p = _round_up(c_res, LANE)
    c_dil_p = _round_up(c_dil, LANE)
    c_skip_p = _round_up(c_skip, LANE)
    c_end_p = _round_up(c_end, LANE)
    c_out_p = _round_up(c_out, LANE)

    f32, bf16 = jnp.float32, jnp.bfloat16

    # input: NCL -> NLC, zero-pad channels to a lane multiple, bf16 operand
    x_nlc = jnp.transpose(x_ncl, (0, 2, 1)).astype(f32)
    x_pad = _pad_to(x_nlc, (n, l_in, c_in_p)).astype(bf16)

    # --- pack / pad / cast weights (wrapper-side, once) ---
    w_start = _pad_to(params["w_start"].astype(f32), (2, c_in_p, c_res_p)).astype(bf16)

    wf = _pad_to(params["wf"].astype(f32), (n_layers, 2, c_res_p, c_dil_p))
    wg = _pad_to(params["wg"].astype(f32), (n_layers, 2, c_res_p, c_dil_p))
    wfg = jnp.concatenate([wf, wg], axis=-1).astype(bf16)      # (nl, 2, c_res_p, 2*c_dil_p)
    bf_ = _pad_to(params["bf"].astype(f32), (n_layers, c_dil_p))
    bg_ = _pad_to(params["bg"].astype(f32), (n_layers, c_dil_p))
    bfg = jnp.concatenate([bf_, bg_], axis=-1)                 # f32 (nl, 2*c_dil_p)

    wr = _pad_to(params["wr"].astype(f32), (n_layers, c_dil_p, c_res_p)).astype(bf16)
    br = _pad_to(params["br"].astype(f32), (n_layers, c_res_p))
    ws = _pad_to(params["ws"].astype(f32), (n_layers, c_dil_p, c_skip_p)).astype(bf16)
    bs = _pad_to(params["bs"].astype(f32), (n_layers, c_skip_p))

    w_end1 = _pad_to(params["w_end1"].astype(f32), (c_skip_p, c_end_p)).astype(bf16)
    b_end1 = _pad_to(params["b_end1"].astype(f32), (1, c_end_p))
    w_end2 = _pad_to(params["w_end2"].astype(f32), (c_end_p, c_out_p)).astype(bf16)
    b_end2 = _pad_to(params["b_end2"].astype(f32), (1, c_out_p))

    args = (x_pad, w_start, wfg, bfg, wr, br, ws, bs,
            w_end1, b_end1, w_end2, b_end2)

    in_specs = [pl.BlockSpec((1, l_in, c_in_p), lambda b: (b, 0, 0))]
    for a in args[1:]:
        # full-array blocks with a constant index map -> weights stay VMEM-resident
        in_specs.append(pl.BlockSpec(a.shape, _const_index_map(a.ndim)))
    out_spec = pl.BlockSpec((1, output_width, c_out_p), lambda b: (b, 0, 0))

    # explicit scoped-VMEM sizing (v5e defaults to 16 MiB scoped)
    weight_bytes = sum(int(a.size) * a.dtype.itemsize for a in args[1:])
    act_bytes = 4 * l_in * max(c_res_p, 2 * c_dil_p, c_skip_p, c_end_p, c_out_p)
    vmem_limit = int(min(64 * 1024 * 1024,
                         max(2 * weight_bytes + 16 * act_bytes + (4 << 20),
                             16 * 1024 * 1024)))

    out = pl.pallas_call(
        make_wavenet_kernel(dilations, output_width, c_dil_p),
        grid=(n,),
        out_shape=jax.ShapeDtypeStruct((n, output_width, c_out_p), f32),
        in_specs=in_specs,
        out_specs=out_spec,
        compiler_params=pltpu.CompilerParams(
            dimension_semantics=("parallel",),
            vmem_limit_bytes=vmem_limit),
    )(*args)

    out = out[:, :, :c_out]                    # strip lane padding
    return jnp.transpose(out, (0, 2, 1))       # (N, num_classes, output_width)


def init_params(key, num_classes, c_res, c_dil, c_skip, c_end, n_layers):
    ks = jax.random.split(key, 14)
    s = 0.1
    p = {}
    p["w_start"] = s * jax.random.normal(ks[0], (2, num_classes, c_res), jnp.float32)
    p["wf"] = s * jax.random.normal(ks[1], (n_layers, 2, c_res, c_dil), jnp.float32)
    p["bf"] = s * jax.random.normal(ks[2], (n_layers, c_dil), jnp.float32)
    p["wg"] = s * jax.random.normal(ks[3], (n_layers, 2, c_res, c_dil), jnp.float32)
    p["bg"] = s * jax.random.normal(ks[4], (n_layers, c_dil), jnp.float32)
    p["wr"] = s * jax.random.normal(ks[5], (n_layers, c_dil, c_res), jnp.float32)
    p["br"] = s * jax.random.normal(ks[6], (n_layers, c_res), jnp.float32)
    p["ws"] = s * jax.random.normal(ks[7], (n_layers, c_dil, c_skip), jnp.float32)
    p["bs"] = s * jax.random.normal(ks[8], (n_layers, c_skip), jnp.float32)
    p["w_end1"] = s * jax.random.normal(ks[9], (c_skip, c_end), jnp.float32)
    p["b_end1"] = s * jax.random.normal(ks[10], (1, c_end), jnp.float32)
    p["w_end2"] = s * jax.random.normal(ks[11], (c_end, num_classes), jnp.float32)
    p["b_end2"] = s * jax.random.normal(ks[12], (1, num_classes), jnp.float32)
    return p


def reference_forward(x_ncl, params, dilations, output_width):
    # pure-JAX mirror of the PyTorch Model.forward (label=None, gc=False)
    x = jnp.transpose(x_ncl, (0, 2, 1)).astype(jnp.float32)   # (N, L_in, C)
    n, l_in, _ = x.shape
    L = l_in - 1
    w0 = params["w_start"][0].astype(jnp.float32)
    w1 = params["w_start"][1].astype(jnp.float32)
    cur = (jnp.einsum("nlc,co->nlo", x[:, :L, :], w0)
           + jnp.einsum("nlc,co->nlo", x[:, 1:L + 1, :], w1))
    skip_sum = 0.0
    for li, d in enumerate(dilations):
        shifted = jnp.concatenate(
            [jnp.zeros((n, d, cur.shape[2]), jnp.float32), cur[:, :L - d, :]], axis=1)
        f = (jnp.einsum("nlc,co->nlo", shifted, params["wf"][li, 0].astype(jnp.float32))
             + jnp.einsum("nlc,co->nlo", cur, params["wf"][li, 1].astype(jnp.float32))
             + params["bf"][li])
        g = (jnp.einsum("nlc,co->nlo", shifted, params["wg"][li, 0].astype(jnp.float32))
             + jnp.einsum("nlc,co->nlo", cur, params["wg"][li, 1].astype(jnp.float32))
             + params["bg"][li])
        z = jnp.tanh(f) * jax.nn.sigmoid(g)
        skip = jnp.einsum("nlc,co->nlo", z, params["ws"][li].astype(jnp.float32)) + params["bs"][li]
        res = jnp.einsum("nlc,co->nlo", z, params["wr"][li].astype(jnp.float32)) + params["br"][li]
        cur = res + cur
        skip_sum = skip_sum + skip[:, L - output_width:, :]
    e1 = jnp.einsum("nlc,co->nlo", skip_sum,
                    params["w_end1"].astype(jnp.float32)) + params["b_end1"][0]
    e1 = jnp.where(e1 > 0, e1, 0.01 * e1)
    e2 = jnp.einsum("nlc,co->nlo", e1,
                    params["w_end2"].astype(jnp.float32)) + params["b_end2"][0]
    e2 = jnp.where(e2 > 0, e2, 0.01 * e2)
    return jnp.transpose(e2, (0, 2, 1))


if __name__ == "__main__":
    # Small WaveNet config (constructor args of Model, shrunk):
    layers, blocks = 2, 2
    num_classes = 16
    residual_channels = 8
    dilation_channels = 8
    skip_channels = 8
    end_channels = 16
    output_length = 4
    N, L_in = 2, 16

    # dilations exactly as Model.__init__ builds them
    dilations = []
    for _b in range(blocks):
        d = 1
        for _i in range(layers):
            dilations.append(d)
            d *= 2
    n_layers = len(dilations)

    key = jax.random.PRNGKey(0)
    kx, kp = jax.random.split(key)
    # PyTorch-style input: (N, C_in=num_classes, L_in)
    x = jax.random.normal(kx, (N, num_classes, L_in), jnp.float32)
    params = init_params(kp, num_classes, residual_channels, dilation_channels,
                         skip_channels, end_channels, n_layers)
    # bf16 master weights (biases stay f32); both kernel and reference use them
    params = {k: (v.astype(jnp.bfloat16) if k.startswith("w") else v)
              for k, v in params.items()}

    out = jax.block_until_ready(
        wavenet_forward(x, params, tuple(dilations), output_length))
    assert out.shape == (N, num_classes, output_length)

    ref = jax.block_until_ready(
        reference_forward(x, params, dilations, output_length))
    if not jnp.allclose(out, ref, atol=2e-2, rtol=2e-2):
        raise AssertionError("Pallas kernel mismatch vs reference")

    print("KERNEL_OK")
</pallas_src>

<mosaic_0001>
module attributes {stable_mosaic.version = 11 : i64} {
  func.func @kernel(%arg0: i32, %arg1: memref<1x16x128xbf16, #tpu.memory_space<vmem>>, %arg2: memref<2x128x128xbf16, #tpu.memory_space<vmem>>, %arg3: memref<4x2x128x256xbf16, #tpu.memory_space<vmem>>, %arg4: memref<4x256xf32, #tpu.memory_space<vmem>>, %arg5: memref<4x128x128xbf16, #tpu.memory_space<vmem>>, %arg6: memref<4x128xf32, #tpu.memory_space<vmem>>, %arg7: memref<4x128x128xbf16, #tpu.memory_space<vmem>>, %arg8: memref<4x128xf32, #tpu.memory_space<vmem>>, %arg9: memref<128x128xbf16, #tpu.memory_space<vmem>>, %arg10: memref<1x128xf32, #tpu.memory_space<vmem>>, %arg11: memref<128x128xbf16, #tpu.memory_space<vmem>>, %arg12: memref<1x128xf32, #tpu.memory_space<vmem>>, %arg13: memref<1x4x128xf32, #tpu.memory_space<vmem>>) attributes {dimension_semantics = [#tpu.dimension_semantics<parallel>], iteration_bounds = array<i64: 2>, scalar_prefetch = 0 : i64, scratch_operands = 0 : i64, tpu.core_type = #tpu.core_type<tc>, window_params = [{transform_indices = @transform_0, window_bounds = array<i64: 1, 16, 128>}, {pipeline_mode = #tpu.pipeline_mode<synchronous>, transform_indices = @transform_1, window_bounds = array<i64: 2, 128, 128>}, {pipeline_mode = #tpu.pipeline_mode<synchronous>, transform_indices = @transform_2, window_bounds = array<i64: 4, 2, 128, 256>}, {pipeline_mode = #tpu.pipeline_mode<synchronous>, transform_indices = @transform_3, window_bounds = array<i64: 4, 256>}, {pipeline_mode = #tpu.pipeline_mode<synchronous>, transform_indices = @transform_4, window_bounds = array<i64: 4, 128, 128>}, {pipeline_mode = #tpu.pipeline_mode<synchronous>, transform_indices = @transform_5, window_bounds = array<i64: 4, 128>}, {pipeline_mode = #tpu.pipeline_mode<synchronous>, transform_indices = @transform_6, window_bounds = array<i64: 4, 128, 128>}, {pipeline_mode = #tpu.pipeline_mode<synchronous>, transform_indices = @transform_7, window_bounds = array<i64: 4, 128>}, {pipeline_mode = #tpu.pipeline_mode<synchronous>, transform_indices = @transform_8, window_bounds = array<i64: 128, 128>}, {pipeline_mode = #tpu.pipeline_mode<synchronous>, transform_indices = @transform_9, window_bounds = array<i64: 1, 128>}, {pipeline_mode = #tpu.pipeline_mode<synchronous>, transform_indices = @transform_10, window_bounds = array<i64: 128, 128>}, {pipeline_mode = #tpu.pipeline_mode<synchronous>, transform_indices = @transform_11, window_bounds = array<i64: 1, 128>}, {transform_indices = @transform_12, window_bounds = array<i64: 1, 4, 128>}]} {
    %c0 = arith.constant 0 : index
    %c0_0 = arith.constant 0 : index
    %c0_1 = arith.constant 0 : index
    %0 = vector.load %arg1[%c0, %c0_0, %c0_1] : memref<1x16x128xbf16, #tpu.memory_space<vmem>>, vector<1x16x128xbf16>
    %1 = vector.shape_cast %0 : vector<1x16x128xbf16> to vector<16x128xbf16>
    %c0_2 = arith.constant 0 : index
    %c0_3 = arith.constant 0 : index
    %c0_4 = arith.constant 0 : index
    %2 = vector.load %arg2[%c0_2, %c0_3, %c0_4] : memref<2x128x128xbf16, #tpu.memory_space<vmem>>, vector<1x128x128xbf16>
    %3 = vector.shape_cast %2 : vector<1x128x128xbf16> to vector<128x128xbf16>
    %cst = arith.constant dense<0.000000e+00> : vector<16x128xf32>
    %4 = tpu.matmul %1, %3, %cst {dimension_numbers = #tpu.dot_dimension_numbers<[1], [0], [0], [1], [0, 0, 1, 1], [], []>} : vector<16x128xbf16>, vector<128x128xbf16>, vector<16x128xf32> -> vector<16x128xf32>
    %c1 = arith.constant 1 : index
    %c0_5 = arith.constant 0 : index
    %c0_6 = arith.constant 0 : index
    %5 = vector.load %arg2[%c1, %c0_5, %c0_6] : memref<2x128x128xbf16, #tpu.memory_space<vmem>>, vector<1x128x128xbf16>
    %6 = vector.shape_cast %5 : vector<1x128x128xbf16> to vector<128x128xbf16>
    %cst_7 = arith.constant dense<0.000000e+00> : vector<16x128xf32>
    %7 = tpu.matmul %1, %6, %cst_7 {dimension_numbers = #tpu.dot_dimension_numbers<[1], [0], [0], [1], [0, 0, 1, 1], [], []>} : vector<16x128xbf16>, vector<128x128xbf16>, vector<16x128xf32> -> vector<16x128xf32>
    %8 = vector.extract_strided_slice %4 {offsets = [0, 0], sizes = [15, 128], strides = [1, 1]} : vector<16x128xf32> to vector<15x128xf32>
    %9 = vector.extract_strided_slice %7 {offsets = [1, 0], sizes = [15, 128], strides = [1, 1]} : vector<16x128xf32> to vector<15x128xf32>
    %10 = arith.addf %8, %9 : vector<15x128xf32>
    %cst_8 = arith.constant 0.000000e+00 : f32
    %11 = vector.broadcast %cst_8 : f32 to vector<4x128xf32>
    %12 = arith.truncf %10 : vector<15x128xf32> to vector<15x128xbf16>
    %c0_9 = arith.constant 0 : index
    %c1_10 = arith.constant 1 : index
    %c0_11 = arith.constant 0 : index
    %c0_12 = arith.constant 0 : index
    %13 = vector.load %arg3[%c0_9, %c1_10, %c0_11, %c0_12] : memref<4x2x128x256xbf16, #tpu.memory_space<vmem>>, vector<1x1x128x256xbf16>
    %14 = vector.shape_cast %13 : vector<1x1x128x256xbf16> to vector<128x256xbf16>
    %cst_13 = arith.constant dense<0.000000e+00> : vector<15x256xf32>
    %15 = tpu.matmul %12, %14, %cst_13 {dimension_numbers = #tpu.dot_dimension_numbers<[1], [0], [0], [1], [0, 0, 1, 1], [], []>} : vector<15x128xbf16>, vector<128x256xbf16>, vector<15x256xf32> -> vector<15x256xf32>
    %c0_14 = arith.constant 0 : index
    %c0_15 = arith.constant 0 : index
    %16 = vector.load %arg4[%c0_14, %c0_15] : memref<4x256xf32, #tpu.memory_space<vmem>>, vector<1x256xf32>
    %17 = vector.broadcast %16 : vector<1x256xf32> to vector<15x256xf32>
    %18 = arith.addf %15, %17 : vector<15x256xf32>
    %19 = vector.extract_strided_slice %12 {offsets = [0, 0], sizes = [14, 128], strides = [1, 1]} : vector<15x128xbf16> to vector<14x128xbf16>
    %c0_16 = arith.constant 0 : index
    %c0_17 = arith.constant 0 : index
    %c0_18 = arith.constant 0 : index
    %c0_19 = arith.constant 0 : index
    %20 = vector.load %arg3[%c0_16, %c0_17, %c0_18, %c0_19] : memref<4x2x128x256xbf16, #tpu.memory_space<vmem>>, vector<1x1x128x256xbf16>
    %21 = vector.shape_cast %20 : vector<1x1x128x256xbf16> to vector<128x256xbf16>
    %cst_20 = arith.constant dense<0.000000e+00> : vector<14x256xf32>
    %22 = tpu.matmul %19, %21, %cst_20 {dimension_numbers = #tpu.dot_dimension_numbers<[1], [0], [0], [1], [0, 0, 1, 1], [], []>} : vector<14x128xbf16>, vector<128x256xbf16>, vector<14x256xf32> -> vector<14x256xf32>
    %23 = vector.extract_strided_slice %18 {offsets = [0, 0], sizes = [1, 256], strides = [1, 1]} : vector<15x256xf32> to vector<1x256xf32>
    %24 = vector.extract_strided_slice %18 {offsets = [1, 0], sizes = [14, 256], strides = [1, 1]} : vector<15x256xf32> to vector<14x256xf32>
    %25 = arith.addf %24, %22 : vector<14x256xf32>
    %26 = tpu.concatenate %23, %25 in 0 : vector<1x256xf32>, vector<14x256xf32> -> vector<15x256xf32>
    %27 = vector.extract_strided_slice %26 {offsets = [0, 0], sizes = [15, 128], strides = [1, 1]} : vector<15x256xf32> to vector<15x128xf32>
    %28 = vector.extract_strided_slice %26 {offsets = [0, 128], sizes = [15, 128], strides = [1, 1]} : vector<15x256xf32> to vector<15x128xf32>
    %29 = math.tanh %27 : vector<15x128xf32>
    %30 = arith.negf %28 : vector<15x128xf32>
    %31 = math.exp %30 : vector<15x128xf32>
    %cst_21 = arith.constant 1.000000e+00 : f32
    %32 = vector.broadcast %cst_21 : f32 to vector<15x128xf32>
    %33 = arith.addf %32, %31 : vector<15x128xf32>
    %34 = arith.divf %32, %33 : vector<15x128xf32>
    %35 = arith.mulf %29, %34 : vector<15x128xf32>
    %36 = arith.truncf %35 : vector<15x128xf32> to vector<15x128xbf16>
    %37 = vector.extract_strided_slice %36 {offsets = [11, 0], sizes = [4, 128], strides = [1, 1]} : vector<15x128xbf16> to vector<4x128xbf16>
    %c0_22 = arith.constant 0 : index
    %c0_23 = arith.constant 0 : index
    %c0_24 = arith.constant 0 : index
    %38 = vector.load %arg7[%c0_22, %c0_23, %c0_24] : memref<4x128x128xbf16, #tpu.memory_space<vmem>>, vector<1x128x128xbf16>
    %39 = vector.shape_cast %38 : vector<1x128x128xbf16> to vector<128x128xbf16>
    %cst_25 = arith.constant dense<0.000000e+00> : vector<4x128xf32>
    %40 = tpu.matmul %37, %39, %cst_25 {dimension_numbers = #tpu.dot_dimension_numbers<[1], [0], [0], [1], [0, 0, 1, 1], [], []>} : vector<4x128xbf16>, vector<128x128xbf16>, vector<4x128xf32> -> vector<4x128xf32>
    %c0_26 = arith.constant 0 : index
    %c0_27 = arith.constant 0 : index
    %41 = vector.load %arg8[%c0_26, %c0_27] : memref<4x128xf32, #tpu.memory_space<vmem>>, vector<1x128xf32>
    %42 = vector.broadcast %41 : vector<1x128xf32> to vector<4x128xf32>
    %43 = arith.addf %40, %42 : vector<4x128xf32>
    %44 = arith.addf %11, %43 : vector<4x128xf32>
    %c0_28 = arith.constant 0 : index
    %c0_29 = arith.constant 0 : index
    %c0_30 = arith.constant 0 : index
    %45 = vector.load %arg5[%c0_28, %c0_29, %c0_30] : memref<4x128x128xbf16, #tpu.memory_space<vmem>>, vector<1x128x128xbf16>
    %46 = vector.shape_cast %45 : vector<1x128x128xbf16> to vector<128x128xbf16>
    %cst_31 = arith.constant dense<0.000000e+00> : vector<15x128xf32>
    %47 = tpu.matmul %36, %46, %cst_31 {dimension_numbers = #tpu.dot_dimension_numbers<[1], [0], [0], [1], [0, 0, 1, 1], [], []>} : vector<15x128xbf16>, vector<128x128xbf16>, vector<15x128xf32> -> vector<15x128xf32>
    %c0_32 = arith.constant 0 : index
    %c0_33 = arith.constant 0 : index
    %48 = vector.load %arg6[%c0_32, %c0_33] : memref<4x128xf32, #tpu.memory_space<vmem>>, vector<1x128xf32>
    %49 = vector.broadcast %48 : vector<1x128xf32> to vector<15x128xf32>
    %50 = arith.addf %47, %49 : vector<15x128xf32>
    %51 = arith.addf %10, %50 : vector<15x128xf32>
    %52 = arith.truncf %51 : vector<15x128xf32> to vector<15x128xbf16>
    %c1_34 = arith.constant 1 : index
    %c1_35 = arith.constant 1 : index
    %c0_36 = arith.constant 0 : index
    %c0_37 = arith.constant 0 : index
    %53 = vector.load %arg3[%c1_34, %c1_35, %c0_36, %c0_37] : memref<4x2x128x256xbf16, #tpu.memory_space<vmem>>, vector<1x1x128x256xbf16>
    %54 = vector.shape_cast %53 : vector<1x1x128x256xbf16> to vector<128x256xbf16>
    %cst_38 = arith.constant dense<0.000000e+00> : vector<15x256xf32>
    %55 = tpu.matmul %52, %54, %cst_38 {dimension_numbers = #tpu.dot_dimension_numbers<[1], [0], [0], [1], [0, 0, 1, 1], [], []>} : vector<15x128xbf16>, vector<128x256xbf16>, vector<15x256xf32> -> vector<15x256xf32>
    %c1_39 = arith.constant 1 : index
    %c0_40 = arith.constant 0 : index
    %56 = vector.load %arg4[%c1_39, %c0_40] : memref<4x256xf32, #tpu.memory_space<vmem>>, vector<1x256xf32>
    %57 = vector.broadcast %56 : vector<1x256xf32> to vector<15x256xf32>
    %58 = arith.addf %55, %57 : vector<15x256xf32>
    %59 = vector.extract_strided_slice %52 {offsets = [0, 0], sizes = [13, 128], strides = [1, 1]} : vector<15x128xbf16> to vector<13x128xbf16>
    %c1_41 = arith.constant 1 : index
    %c0_42 = arith.constant 0 : index
    %c0_43 = arith.constant 0 : index
    %c0_44 = arith.constant 0 : index
    %60 = vector.load %arg3[%c1_41, %c0_42, %c0_43, %c0_44] : memref<4x2x128x256xbf16, #tpu.memory_space<vmem>>, vector<1x1x128x256xbf16>
    %61 = vector.shape_cast %60 : vector<1x1x128x256xbf16> to vector<128x256xbf16>
    %cst_45 = arith.constant dense<0.000000e+00> : vector<13x256xf32>
    %62 = tpu.matmul %59, %61, %cst_45 {dimension_numbers = #tpu.dot_dimension_numbers<[1], [0], [0], [1], [0, 0, 1, 1], [], []>} : vector<13x128xbf16>, vector<128x256xbf16>, vector<13x256xf32> -> vector<13x256xf32>
    %63 = vector.extract_strided_slice %58 {offsets = [0, 0], sizes = [2, 256], strides = [1, 1]} : vector<15x256xf32> to vector<2x256xf32>
    %64 = vector.extract_strided_slice %58 {offsets = [2, 0], sizes = [13, 256], strides = [1, 1]} : vector<15x256xf32> to vector<13x256xf32>
    %65 = arith.addf %64, %62 : vector<13x256xf32>
    %66 = tpu.concatenate %63, %65 in 0 : vector<2x256xf32>, vector<13x256xf32> -> vector<15x256xf32>
    %67 = vector.extract_strided_slice %66 {offsets = [0, 0], sizes = [15, 128], strides = [1, 1]} : vector<15x256xf32> to vector<15x128xf32>
    %68 = vector.extract_strided_slice %66 {offsets = [0, 128], sizes = [15, 128], strides = [1, 1]} : vector<15x256xf32> to vector<15x128xf32>
    %69 = math.tanh %67 : vector<15x128xf32>
    %70 = arith.negf %68 : vector<15x128xf32>
    %71 = math.exp %70 : vector<15x128xf32>
    %cst_46 = arith.constant 1.000000e+00 : f32
    %72 = vector.broadcast %cst_46 : f32 to vector<15x128xf32>
    %73 = arith.addf %72, %71 : vector<15x128xf32>
    %74 = arith.divf %72, %73 : vector<15x128xf32>
    %75 = arith.mulf %69, %74 : vector<15x128xf32>
    %76 = arith.truncf %75 : vector<15x128xf32> to vector<15x128xbf16>
    %77 = vector.extract_strided_slice %76 {offsets = [11, 0], sizes = [4, 128], strides = [1, 1]} : vector<15x128xbf16> to vector<4x128xbf16>
    %c1_47 = arith.constant 1 : index
    %c0_48 = arith.constant 0 : index
    %c0_49 = arith.constant 0 : index
    %78 = vector.load %arg7[%c1_47, %c0_48, %c0_49] : memref<4x128x128xbf16, #tpu.memory_space<vmem>>, vector<1x128x128xbf16>
    %79 = vector.shape_cast %78 : vector<1x128x128xbf16> to vector<128x128xbf16>
    %cst_50 = arith.constant dense<0.000000e+00> : vector<4x128xf32>
    %80 = tpu.matmul %77, %79, %cst_50 {dimension_numbers = #tpu.dot_dimension_numbers<[1], [0], [0], [1], [0, 0, 1, 1], [], []>} : vector<4x128xbf16>, vector<128x128xbf16>, vector<4x128xf32> -> vector<4x128xf32>
    %c1_51 = arith.constant 1 : index
    %c0_52 = arith.constant 0 : index
    %81 = vector.load %arg8[%c1_51, %c0_52] : memref<4x128xf32, #tpu.memory_space<vmem>>, vector<1x128xf32>
    %82 = vector.broadcast %81 : vector<1x128xf32> to vector<4x128xf32>
    %83 = arith.addf %80, %82 : vector<4x128xf32>
    %84 = arith.addf %44, %83 : vector<4x128xf32>
    %c1_53 = arith.constant 1 : index
    %c0_54 = arith.constant 0 : index
    %c0_55 = arith.constant 0 : index
    %85 = vector.load %arg5[%c1_53, %c0_54, %c0_55] : memref<4x128x128xbf16, #tpu.memory_space<vmem>>, vector<1x128x128xbf16>
    %86 = vector.shape_cast %85 : vector<1x128x128xbf16> to vector<128x128xbf16>
    %cst_56 = arith.constant dense<0.000000e+00> : vector<15x128xf32>
    %87 = tpu.matmul %76, %86, %cst_56 {dimension_numbers = #tpu.dot_dimension_numbers<[1], [0], [0], [1], [0, 0, 1, 1], [], []>} : vector<15x128xbf16>, vector<128x128xbf16>, vector<15x128xf32> -> vector<15x128xf32>
    %c1_57 = arith.constant 1 : index
    %c0_58 = arith.constant 0 : index
    %88 = vector.load %arg6[%c1_57, %c0_58] : memref<4x128xf32, #tpu.memory_space<vmem>>, vector<1x128xf32>
    %89 = vector.broadcast %88 : vector<1x128xf32> to vector<15x128xf32>
    %90 = arith.addf %87, %89 : vector<15x128xf32>
    %91 = arith.addf %51, %90 : vector<15x128xf32>
    %92 = arith.truncf %91 : vector<15x128xf32> to vector<15x128xbf16>
    %c2 = arith.constant 2 : index
    %c1_59 = arith.constant 1 : index
    %c0_60 = arith.constant 0 : index
    %c0_61 = arith.constant 0 : index
    %93 = vector.load %arg3[%c2, %c1_59, %c0_60, %c0_61] : memref<4x2x128x256xbf16, #tpu.memory_space<vmem>>, vector<1x1x128x256xbf16>
    %94 = vector.shape_cast %93 : vector<1x1x128x256xbf16> to vector<128x256xbf16>
    %cst_62 = arith.constant dense<0.000000e+00> : vector<15x256xf32>
    %95 = tpu.matmul %92, %94, %cst_62 {dimension_numbers = #tpu.dot_dimension_numbers<[1], [0], [0], [1], [0, 0, 1, 1], [], []>} : vector<15x128xbf16>, vector<128x256xbf16>, vector<15x256xf32> -> vector<15x256xf32>
    %c2_63 = arith.constant 2 : index
    %c0_64 = arith.constant 0 : index
    %96 = vector.load %arg4[%c2_63, %c0_64] : memref<4x256xf32, #tpu.memory_space<vmem>>, vector<1x256xf32>
    %97 = vector.broadcast %96 : vector<1x256xf32> to vector<15x256xf32>
    %98 = arith.addf %95, %97 : vector<15x256xf32>
    %99 = vector.extract_strided_slice %92 {offsets = [0, 0], sizes = [14, 128], strides = [1, 1]} : vector<15x128xbf16> to vector<14x128xbf16>
    %c2_65 = arith.constant 2 : index
    %c0_66 = arith.constant 0 : index
    %c0_67 = arith.constant 0 : index
    %c0_68 = arith.constant 0 : index
    %100 = vector.load %arg3[%c2_65, %c0_66, %c0_67, %c0_68] : memref<4x2x128x256xbf16, #tpu.memory_space<vmem>>, vector<1x1x128x256xbf16>
    %101 = vector.shape_cast %100 : vector<1x1x128x256xbf16> to vector<128x256xbf16>
    %cst_69 = arith.constant dense<0.000000e+00> : vector<14x256xf32>
    %102 = tpu.matmul %99, %101, %cst_69 {dimension_numbers = #tpu.dot_dimension_numbers<[1], [0], [0], [1], [0, 0, 1, 1], [], []>} : vector<14x128xbf16>, vector<128x256xbf16>, vector<14x256xf32> -> vector<14x256xf32>
    %103 = vector.extract_strided_slice %98 {offsets = [0, 0], sizes = [1, 256], strides = [1, 1]} : vector<15x256xf32> to vector<1x256xf32>
    %104 = vector.extract_strided_slice %98 {offsets = [1, 0], sizes = [14, 256], strides = [1, 1]} : vector<15x256xf32> to vector<14x256xf32>
    %105 = arith.addf %104, %102 : vector<14x256xf32>
    %106 = tpu.concatenate %103, %105 in 0 : vector<1x256xf32>, vector<14x256xf32> -> vector<15x256xf32>
    %107 = vector.extract_strided_slice %106 {offsets = [0, 0], sizes = [15, 128], strides = [1, 1]} : vector<15x256xf32> to vector<15x128xf32>
    %108 = vector.extract_strided_slice %106 {offsets = [0, 128], sizes = [15, 128], strides = [1, 1]} : vector<15x256xf32> to vector<15x128xf32>
    %109 = math.tanh %107 : vector<15x128xf32>
    %110 = arith.negf %108 : vector<15x128xf32>
    %111 = math.exp %110 : vector<15x128xf32>
    %cst_70 = arith.constant 1.000000e+00 : f32
    %112 = vector.broadcast %cst_70 : f32 to vector<15x128xf32>
    %113 = arith.addf %112, %111 : vector<15x128xf32>
    %114 = arith.divf %112, %113 : vector<15x128xf32>
    %115 = arith.mulf %109, %114 : vector<15x128xf32>
    %116 = arith.truncf %115 : vector<15x128xf32> to vector<15x128xbf16>
    %117 = vector.extract_strided_slice %116 {offsets = [11, 0], sizes = [4, 128], strides = [1, 1]} : vector<15x128xbf16> to vector<4x128xbf16>
    %c2_71 = arith.constant 2 : index
    %c0_72 = arith.constant 0 : index
    %c0_73 = arith.constant 0 : index
    %118 = vector.load %arg7[%c2_71, %c0_72, %c0_73] : memref<4x128x128xbf16, #tpu.memory_space<vmem>>, vector<1x128x128xbf16>
    %119 = vector.shape_cast %118 : vector<1x128x128xbf16> to vector<128x128xbf16>
    %cst_74 = arith.constant dense<0.000000e+00> : vector<4x128xf32>
    %120 = tpu.matmul %117, %119, %cst_74 {dimension_numbers = #tpu.dot_dimension_numbers<[1], [0], [0], [1], [0, 0, 1, 1], [], []>} : vector<4x128xbf16>, vector<128x128xbf16>, vector<4x128xf32> -> vector<4x128xf32>
    %c2_75 = arith.constant 2 : index
    %c0_76 = arith.constant 0 : index
    %121 = vector.load %arg8[%c2_75, %c0_76] : memref<4x128xf32, #tpu.memory_space<vmem>>, vector<1x128xf32>
    %122 = vector.broadcast %121 : vector<1x128xf32> to vector<4x128xf32>
    %123 = arith.addf %120, %122 : vector<4x128xf32>
    %124 = arith.addf %84, %123 : vector<4x128xf32>
    %c2_77 = arith.constant 2 : index
    %c0_78 = arith.constant 0 : index
    %c0_79 = arith.constant 0 : index
    %125 = vector.load %arg5[%c2_77, %c0_78, %c0_79] : memref<4x128x128xbf16, #tpu.memory_space<vmem>>, vector<1x128x128xbf16>
    %126 = vector.shape_cast %125 : vector<1x128x128xbf16> to vector<128x128xbf16>
    %cst_80 = arith.constant dense<0.000000e+00> : vector<15x128xf32>
    %127 = tpu.matmul %116, %126, %cst_80 {dimension_numbers = #tpu.dot_dimension_numbers<[1], [0], [0], [1], [0, 0, 1, 1], [], []>} : vector<15x128xbf16>, vector<128x128xbf16>, vector<15x128xf32> -> vector<15x128xf32>
    %c2_81 = arith.constant 2 : index
    %c0_82 = arith.constant 0 : index
    %128 = vector.load %arg6[%c2_81, %c0_82] : memref<4x128xf32, #tpu.memory_space<vmem>>, vector<1x128xf32>
    %129 = vector.broadcast %128 : vector<1x128xf32> to vector<15x128xf32>
    %130 = arith.addf %127, %129 : vector<15x128xf32>
    %131 = arith.addf %91, %130 : vector<15x128xf32>
    %132 = arith.truncf %131 : vector<15x128xf32> to vector<15x128xbf16>
    %c3 = arith.constant 3 : index
    %c1_83 = arith.constant 1 : index
    %c0_84 = arith.constant 0 : index
    %c0_85 = arith.constant 0 : index
    %133 = vector.load %arg3[%c3, %c1_83, %c0_84, %c0_85] : memref<4x2x128x256xbf16, #tpu.memory_space<vmem>>, vector<1x1x128x256xbf16>
    %134 = vector.shape_cast %133 : vector<1x1x128x256xbf16> to vector<128x256xbf16>
    %cst_86 = arith.constant dense<0.000000e+00> : vector<15x256xf32>
    %135 = tpu.matmul %132, %134, %cst_86 {dimension_numbers = #tpu.dot_dimension_numbers<[1], [0], [0], [1], [0, 0, 1, 1], [], []>} : vector<15x128xbf16>, vector<128x256xbf16>, vector<15x256xf32> -> vector<15x256xf32>
    %c3_87 = arith.constant 3 : index
    %c0_88 = arith.constant 0 : index
    %136 = vector.load %arg4[%c3_87, %c0_88] : memref<4x256xf32, #tpu.memory_space<vmem>>, vector<1x256xf32>
    %137 = vector.broadcast %136 : vector<1x256xf32> to vector<15x256xf32>
    %138 = arith.addf %135, %137 : vector<15x256xf32>
    %139 = vector.extract_strided_slice %132 {offsets = [0, 0], sizes = [13, 128], strides = [1, 1]} : vector<15x128xbf16> to vector<13x128xbf16>
    %c3_89 = arith.constant 3 : index
    %c0_90 = arith.constant 0 : index
    %c0_91 = arith.constant 0 : index
    %c0_92 = arith.constant 0 : index
    %140 = vector.load %arg3[%c3_89, %c0_90, %c0_91, %c0_92] : memref<4x2x128x256xbf16, #tpu.memory_space<vmem>>, vector<1x1x128x256xbf16>
    %141 = vector.shape_cast %140 : vector<1x1x128x256xbf16> to vector<128x256xbf16>
    %cst_93 = arith.constant dense<0.000000e+00> : vector<13x256xf32>
    %142 = tpu.matmul %139, %141, %cst_93 {dimension_numbers = #tpu.dot_dimension_numbers<[1], [0], [0], [1], [0, 0, 1, 1], [], []>} : vector<13x128xbf16>, vector<128x256xbf16>, vector<13x256xf32> -> vector<13x256xf32>
    %143 = vector.extract_strided_slice %138 {offsets = [0, 0], sizes = [2, 256], strides = [1, 1]} : vector<15x256xf32> to vector<2x256xf32>
    %144 = vector.extract_strided_slice %138 {offsets = [2, 0], sizes = [13, 256], strides = [1, 1]} : vector<15x256xf32> to vector<13x256xf32>
    %145 = arith.addf %144, %142 : vector<13x256xf32>
    %146 = tpu.concatenate %143, %145 in 0 : vector<2x256xf32>, vector<13x256xf32> -> vector<15x256xf32>
    %147 = vector.extract_strided_slice %146 {offsets = [0, 0], sizes = [15, 128], strides = [1, 1]} : vector<15x256xf32> to vector<15x128xf32>
    %148 = vector.extract_strided_slice %146 {offsets = [0, 128], sizes = [15, 128], strides = [1, 1]} : vector<15x256xf32> to vector<15x128xf32>
    %149 = math.tanh %147 : vector<15x128xf32>
    %150 = arith.negf %148 : vector<15x128xf32>
    %151 = math.exp %150 : vector<15x128xf32>
    %cst_94 = arith.constant 1.000000e+00 : f32
    %152 = vector.broadcast %cst_94 : f32 to vector<15x128xf32>
    %153 = arith.addf %152, %151 : vector<15x128xf32>
    %154 = arith.divf %152, %153 : vector<15x128xf32>
    %155 = arith.mulf %149, %154 : vector<15x128xf32>
    %156 = arith.truncf %155 : vector<15x128xf32> to vector<15x128xbf16>
    %157 = vector.extract_strided_slice %156 {offsets = [11, 0], sizes = [4, 128], strides = [1, 1]} : vector<15x128xbf16> to vector<4x128xbf16>
    %c3_95 = arith.constant 3 : index
    %c0_96 = arith.constant 0 : index
    %c0_97 = arith.constant 0 : index
    %158 = vector.load %arg7[%c3_95, %c0_96, %c0_97] : memref<4x128x128xbf16, #tpu.memory_space<vmem>>, vector<1x128x128xbf16>
    %159 = vector.shape_cast %158 : vector<1x128x128xbf16> to vector<128x128xbf16>
    %cst_98 = arith.constant dense<0.000000e+00> : vector<4x128xf32>
    %160 = tpu.matmul %157, %159, %cst_98 {dimension_numbers = #tpu.dot_dimension_numbers<[1], [0], [0], [1], [0, 0, 1, 1], [], []>} : vector<4x128xbf16>, vector<128x128xbf16>, vector<4x128xf32> -> vector<4x128xf32>
    %c3_99 = arith.constant 3 : index
    %c0_100 = arith.constant 0 : index
    %161 = vector.load %arg8[%c3_99, %c0_100] : memref<4x128xf32, #tpu.memory_space<vmem>>, vector<1x128xf32>
    %162 = vector.broadcast %161 : vector<1x128xf32> to vector<4x128xf32>
    %163 = arith.addf %160, %162 : vector<4x128xf32>
    %164 = arith.addf %124, %163 : vector<4x128xf32>
    %165 = arith.truncf %164 : vector<4x128xf32> to vector<4x128xbf16>
    %c0_101 = arith.constant 0 : index
    %c0_102 = arith.constant 0 : index
    %166 = vector.load %arg9[%c0_101, %c0_102] : memref<128x128xbf16, #tpu.memory_space<vmem>>, vector<128x128xbf16>
    %cst_103 = arith.constant dense<0.000000e+00> : vector<4x128xf32>
    %167 = tpu.matmul %165, %166, %cst_103 {dimension_numbers = #tpu.dot_dimension_numbers<[1], [0], [0], [1], [0, 0, 1, 1], [], []>} : vector<4x128xbf16>, vector<128x128xbf16>, vector<4x128xf32> -> vector<4x128xf32>
    %c0_104 = arith.constant 0 : index
    %c0_105 = arith.constant 0 : index
    %168 = vector.load %arg10[%c0_104, %c0_105] : memref<1x128xf32, #tpu.memory_space<vmem>>, vector<1x128xf32>
    %169 = vector.broadcast %168 : vector<1x128xf32> to vector<4x128xf32>
    %170 = arith.addf %167, %169 : vector<4x128xf32>
    %cst_106 = arith.constant 0.000000e+00 : f32
    %171 = vector.broadcast %cst_106 : f32 to vector<4x128xf32>
    %172 = arith.cmpf ogt, %170, %171 : vector<4x128xf32>
    %cst_107 = arith.constant 0.00999999977 : f32
    %173 = vector.broadcast %cst_107 : f32 to vector<4x128xf32>
    %174 = arith.mulf %173, %170 : vector<4x128xf32>
    %175 = arith.select %172, %170, %174 : vector<4x128xi1>, vector<4x128xf32>
    %176 = arith.truncf %175 : vector<4x128xf32> to vector<4x128xbf16>
    %c0_108 = arith.constant 0 : index
    %c0_109 = arith.constant 0 : index
    %177 = vector.load %arg11[%c0_108, %c0_109] : memref<128x128xbf16, #tpu.memory_space<vmem>>, vector<128x128xbf16>
    %cst_110 = arith.constant dense<0.000000e+00> : vector<4x128xf32>
    %178 = tpu.matmul %176, %177, %cst_110 {dimension_numbers = #tpu.dot_dimension_numbers<[1], [0], [0], [1], [0, 0, 1, 1], [], []>} : vector<4x128xbf16>, vector<128x128xbf16>, vector<4x128xf32> -> vector<4x128xf32>
    %c0_111 = arith.constant 0 : index
    %c0_112 = arith.constant 0 : index
    %179 = vector.load %arg12[%c0_111, %c0_112] : memref<1x128xf32, #tpu.memory_space<vmem>>, vector<1x128xf32>
    %180 = vector.broadcast %179 : vector<1x128xf32> to vector<4x128xf32>
    %181 = arith.addf %178, %180 : vector<4x128xf32>
    %cst_113 = arith.constant 0.000000e+00 : f32
    %182 = vector.broadcast %cst_113 : f32 to vector<4x128xf32>
    %183 = arith.cmpf ogt, %181, %182 : vector<4x128xf32>
    %cst_114 = arith.constant 0.00999999977 : f32
    %184 = vector.broadcast %cst_114 : f32 to vector<4x128xf32>
    %185 = arith.mulf %184, %181 : vector<4x128xf32>
    %186 = arith.select %183, %181, %185 : vector<4x128xi1>, vector<4x128xf32>
    %187 = vector.shape_cast %186 : vector<4x128xf32> to vector<1x4x128xf32>
    %c0_115 = arith.constant 0 : index
    %c0_116 = arith.constant 0 : index
    %c0_117 = arith.constant 0 : index
    %188 = vector.load %arg13[%c0_115, %c0_116, %c0_117] : memref<1x4x128xf32, #tpu.memory_space<vmem>>, vector<1x4x128xf32>
    tpu.vector_store %arg13[%c0_115, %c0_116, %c0_117], %187 {strides = array<i32>} : memref<1x4x128xf32, #tpu.memory_space<vmem>>, vector<1x4x128xf32>,
    return
  }
  func.func @transform_0(%arg0: i32) -> (i32, i32, i32) {
    %c0_i32 = arith.constant 0 : i32
    %c0_i32_0 = arith.constant 0 : i32
    %c0_i32_1 = arith.constant 0 : i32
    return %arg0, %c0_i32, %c0_i32_0 : i32, i32, i32
  }
  func.func @transform_1(%arg0: i32) -> (i32, i32, i32) {
    %c0_i32 = arith.constant 0 : i32
    %c0_i32_0 = arith.constant 0 : i32
    %c0_i32_1 = arith.constant 0 : i32
    %c0_i32_2 = arith.constant 0 : i32
    return %c0_i32, %c0_i32_0, %c0_i32_1 : i32, i32, i32
  }
  func.func @transform_2(%arg0: i32) -> (i32, i32, i32, i32) {
    %c0_i32 = arith.constant 0 : i32
    %c0_i32_0 = arith.constant 0 : i32
    %c0_i32_1 = arith.constant 0 : i32
    %c0_i32_2 = arith.constant 0 : i32
    %c0_i32_3 = arith.constant 0 : i32
    return %c0_i32, %c0_i32_0, %c0_i32_1, %c0_i32_2 : i32, i32, i32, i32
  }
  func.func @transform_3(%arg0: i32) -> (i32, i32) {
    %c0_i32 = arith.constant 0 : i32
    %c0_i32_0 = arith.constant 0 : i32
    %c0_i32_1 = arith.constant 0 : i32
    return %c0_i32, %c0_i32_0 : i32, i32
  }
  func.func @transform_4(%arg0: i32) -> (i32, i32, i32) {
    %c0_i32 = arith.constant 0 : i32
    %c0_i32_0 = arith.constant 0 : i32
    %c0_i32_1 = arith.constant 0 : i32
    %c0_i32_2 = arith.constant 0 : i32
    return %c0_i32, %c0_i32_0, %c0_i32_1 : i32, i32, i32
  }
  func.func @transform_5(%arg0: i32) -> (i32, i32) {
    %c0_i32 = arith.constant 0 : i32
    %c0_i32_0 = arith.constant 0 : i32
    %c0_i32_1 = arith.constant 0 : i32
    return %c0_i32, %c0_i32_0 : i32, i32
  }
  func.func @transform_6(%arg0: i32) -> (i32, i32, i32) {
    %c0_i32 = arith.constant 0 : i32
    %c0_i32_0 = arith.constant 0 : i32
    %c0_i32_1 = arith.constant 0 : i32
    %c0_i32_2 = arith.constant 0 : i32
    return %c0_i32, %c0_i32_0, %c0_i32_1 : i32, i32, i32
  }
  func.func @transform_7(%arg0: i32) -> (i32, i32) {
    %c0_i32 = arith.constant 0 : i32
    %c0_i32_0 = arith.constant 0 : i32
    %c0_i32_1 = arith.constant 0 : i32
    return %c0_i32, %c0_i32_0 : i32, i32
  }
  func.func @transform_8(%arg0: i32) -> (i32, i32) {
    %c0_i32 = arith.constant 0 : i32
    %c0_i32_0 = arith.constant 0 : i32
    %c0_i32_1 = arith.constant 0 : i32
    return %c0_i32, %c0_i32_0 : i32, i32
  }
  func.func @transform_9(%arg0: i32) -> (i32, i32) {
    %c0_i32 = arith.constant 0 : i32
    %c0_i32_0 = arith.constant 0 : i32
    %c0_i32_1 = arith.constant 0 : i32
    return %c0_i32, %c0_i32_0 : i32, i32
  }
  func.func @transform_10(%arg0: i32) -> (i32, i32) {
    %c0_i32 = arith.constant 0 : i32
    %c0_i32_0 = arith.constant 0 : i32
    %c0_i32_1 = arith.constant 0 : i32
    return %c0_i32, %c0_i32_0 : i32, i32
  }
  func.func @transform_11(%arg0: i32) -> (i32, i32) {
    %c0_i32 = arith.constant 0 : i32
    %c0_i32_0 = arith.constant 0 : i32
    %c0_i32_1 = arith.constant 0 : i32
    return %c0_i32, %c0_i32_0 : i32, i32
  }
  func.func @transform_12(%arg0: i32) -> (i32, i32, i32) {
    %c0_i32 = arith.constant 0 : i32
    %c0_i32_0 = arith.constant 0 : i32
    %c0_i32_1 = arith.constant 0 : i32
    return %arg0, %c0_i32, %c0_i32_0 : i32, i32, i32
  }
}

</mosaic_0001>

<llo_original>
// kernel: tpu_custom_call.1
$region0: #{tpu_custom_call.1}
  #allocation0 [shape = 'u32[]', space=smem, size = 0x4, offset = 0x4, fixed_abs, tag = 'smem constant byte address 0x4 - core index']
  #allocation1 [shape = 'u32[72,128]{1,0:T(1,128)}', space=vmem, size = 0x9000, scoped, tag = 'internal scratch']
  %s0 = inlined_call_operand.hbm [shape: bf16[2,16,128], index: 0, kind: input, shape index: {}]
  %s1 = inlined_call_operand.hbm [shape: bf16[2,128,128], index: 1, kind: input, shape index: {}]
  %s2 = inlined_call_operand.hbm [shape: bf16[4,2,128,256], index: 2, kind: input, shape index: {}]
  %s3 = inlined_call_operand.hbm [shape: f32[4,256], index: 3, kind: input, shape index: {}]
  %s4 = inlined_call_operand.hbm [shape: bf16[4,128,128], index: 4, kind: input, shape index: {}]
  %s5 = inlined_call_operand.vmem [shape: f32[4,128], index: 5, kind: input, shape index: {}]
  %s6 = inlined_call_operand.hbm [shape: bf16[4,128,128], index: 6, kind: input, shape index: {}]
  %s7 = inlined_call_operand.hbm [shape: f32[4,128], index: 7, kind: input, shape index: {}]
  %s8 = inlined_call_operand.hbm [shape: bf16[128,128], index: 8, kind: input, shape index: {}]
  %s9 = inlined_call_operand.vmem [shape: f32[1,128], index: 9, kind: input, shape index: {}]
  %s10 = inlined_call_operand.hbm [shape: bf16[128,128], index: 10, kind: input, shape index: {}]
  %s11 = inlined_call_operand.vmem [shape: f32[1,128], index: 11, kind: input, shape index: {}]
  %s12 = inlined_call_operand.hbm [shape: f32[2,4,128], index: 12, kind: output, shape index: {}]
  %s13 = sld [smem:[#allocation0]]
  $region117: #{tpu_custom_call.1} parent=0
    _
  %s15 = ssub.s32 1, %s13
  %s16 = scalar_select 0, %s15, %s13
  $region1: #{tpu_custom_call.1} parent=0
    #allocation2 [shape = 'u8[8192]{0}', space=vmem, size = 0x2000, scoped, tag = 'input window, operand 0']
    #allocation3 [shape = 's32[2]{0}', space=sflag, size = 0x8, scoped, tag = 'scoped memory for tpu_custom_call.1']
    #allocation4 [shape = 's32[2]{0}', space=sflag, size = 0x8, scoped, tag = 'scoped memory for tpu_custom_call.1']
    #allocation5 [shape = 'u8[65536]{0}', space=vmem, size = 0x10000, scoped, tag = 'input window, operand 1, single buffered']
    #allocation6 [shape = 's32[1]{0}', space=sflag, size = 0x4, scoped, tag = 'scoped memory for tpu_custom_call.1']
    #allocation7 [shape = 'u8[524288]{0}', space=vmem, size = 0x80000, scoped, tag = 'input window, operand 2, single buffered']
    #allocation8 [shape = 'u8[4096]{0}', space=vmem, size = 0x1000, scoped, tag = 'input window, operand 3, single buffered']
    #allocation9 [shape = 's32[1]{0}', space=sflag, size = 0x4, scoped, tag = 'scoped memory for tpu_custom_call.1']
    #allocation10 [shape = 'u8[131072]{0}', space=vmem, size = 0x20000, scoped, tag = 'input window, operand 4, single buffered']
    #allocation11 [shape = 'u8[131072]{0}', space=vmem, size = 0x20000, scoped, tag = 'input window, operand 6, single buffered']
    #allocation12 [shape = 's32[1]{0}', space=sflag, size = 0x4, scoped, tag = 'scoped memory for tpu_custom_call.1']
    #allocation13 [shape = 'u8[2048]{0}', space=vmem, size = 0x800, scoped, tag = 'input window, operand 7, single buffered']
    #allocation14 [shape = 'u8[32768]{0}', space=vmem, size = 0x8000, scoped, tag = 'input window, operand 8, single buffered']
    #allocation15 [shape = 's32[1]{0}', space=sflag, size = 0x4, scoped, tag = 'scoped memory for tpu_custom_call.1']
    #allocation16 [shape = 'u8[32768]{0}', space=vmem, size = 0x8000, scoped, tag = 'input window, operand 10, single buffered']
    #allocation17 [shape = 'u8[4096]{0}', space=vmem, size = 0x1000, scoped, tag = 'output window, operand 0']
    %17 = vsyncpa [#allocation3], 0
    %s18 = scalar_lea.sflag [#allocation3], 1
    %19 = vsyncpa %s18, 0
    %20 = vsyncpa [#allocation6], 0
    %21 = vsyncpa [#allocation9], 0
    %22 = vsyncpa [#allocation12], 0
    %23 = vsyncpa [#allocation15], 0
    %24 = vsyncpa [#allocation4], 0
    %s25 = scalar_lea.sflag [#allocation4], 1
    %26 = vsyncpa %s25, 0
    loop: start=0, step=1, limit=4
    $region2: #{tpu_custom_call.1} parent=1 // loop_pre_header
      _
    $region3: #{tpu_custom_call.1} parent=1 // loop_header
      %s28 = sphi 0, %s32
      %p29 = scmp.ge.s32.totalorder %s28, 4
      %s38 = sphi 0, %s40
      %s41 = sphi 0, %s38
      %s42 = sphi 0, %s41
      %s58 = sphi 0, %s42
      %s62 = sphi 0, %s62
      %s64 = sphi 0, %s62
      %s65 = sphi 0, %s64
      %s79 = sphi 0, %s65
      %s83 = sphi 0, %s83
      %s85 = sphi 0, %s83
      %s86 = sphi 0, %s85
      %s100 = sphi 0, %s86
      %s104 = sphi 0, %s104
      %s106 = sphi 0, %s104
      %s107 = sphi 0, %s106
      %s121 = sphi 0, %s107
      %s125 = sphi 0, %s125
      %s127 = sphi 0, %s125
      %s128 = sphi 0, %s127
      %s142 = sphi 0, %s128
      %s146 = sphi 0, %s146
      %s148 = sphi 0, %s146
      %s149 = sphi 0, %s148
      %s163 = sphi 0, %s149
      %s167 = sphi 0, %s167
      %s169 = sphi 0, %s167
      %s170 = sphi 0, %s169
      %s184 = sphi 0, %s170
      %s188 = sphi 0, %s188
      %s190 = sphi 0, %s188
      %s191 = sphi 0, %s190
      %s205 = sphi 0, %s191
      %s209 = sphi 0, %s209
      %s211 = sphi 0, %s209
      %s212 = sphi 0, %s211
      %s226 = sphi 0, %s212
      %s230 = sphi 0, %s230
      %s232 = sphi 0, %s230
      %s233 = sphi 0, %s232
      %s247 = sphi 0, %s233
      %s251 = sphi 0, %s251
      %s253 = sphi 0, %s251
      %s254 = sphi 0, %s253
      %s268 = sphi 0, %s254
      %s272 = sphi 0, %s272
      %s274 = sphi 0, %s272
      %s275 = sphi 0, %s274
      %s289 = sphi 0, %s275
      %s295 = sphi 0, %s297
      %s298 = sphi 0, %s295
      %s299 = sphi 0, %s298
      %s315 = sphi 0, %s299
    $region4: #{tpu_custom_call.1} parent=1 // loop_header_branch
      %31 = sbr.rel (%p29) target = $region8
    $region5: #{tpu_custom_call.1} parent=1 // loop_body
      %s33 = ssub.s32 %s28, 1
      %s34 = ssub.s32 %s28, 2
      %s35 = sadd.s32 %s28, 1
      %s36 = ssub.s32 %s28, %s35
      %p37 = scmp.eq.s32.totalorder %s36, 0
      %s39 = sadd.s32 %s38, 1
      %s40 = scalar_select %p37, %s38, %s39
      %p43 = pneg %p37
      %p44 = scmp.eq.s32.totalorder %s28, 1
      %p45 = por %p43, %p44
      %p46 = scmp.ne.s32.totalorder %s38, %s41
      %p47 = scmp.eq.s32.totalorder %s28, 0
      %p48 = por %p46, %p47
      %p49 = scmp.ne.s32.totalorder %s38, %s41
      %p50 = scmp.eq.s32.totalorder %s33, 1
      %p51 = por %p49, %p50
      %p52 = scmp.ne.s32.totalorder %s41, %s42
      %p53 = scmp.eq.s32.totalorder %s33, 0
      %p54 = por %p52, %p53
      %p55 = scmp.ne.s32.totalorder %s41, %s42
      %p56 = scmp.eq.s32.totalorder %s34, 1
      %p57 = por %p55, %p56
      %p59 = scmp.ne.s32.totalorder %s42, %s58
      %p60 = scmp.eq.s32.totalorder %s34, 0
      %p61 = por %p59, %p60
      %s63 = sadd.s32 %s62, 1
      %p66 = scmp.eq.s32.totalorder %s28, 1
      %p67 = scmp.ne.s32.totalorder %s62, %s64
      %p68 = scmp.eq.s32.totalorder %s28, 0
      %p69 = por %p67, %p68
      %p70 = scmp.ne.s32.totalorder %s62, %s64
      %p71 = scmp.eq.s32.totalorder %s33, 1
      %p72 = por %p70, %p71
      %p73 = scmp.ne.s32.totalorder %s64, %s65
      %p74 = scmp.eq.s32.totalorder %s33, 0
      %p75 = por %p73, %p74
      %p76 = scmp.ne.s32.totalorder %s64, %s65
      %p77 = scmp.eq.s32.totalorder %s34, 1
      %p78 = por %p76, %p77
      %p80 = scmp.ne.s32.totalorder %s65, %s79
      %p81 = scmp.eq.s32.totalorder %s34, 0
      %p82 = por %p80, %p81
      %s84 = sadd.s32 %s83, 1
      %p87 = scmp.eq.s32.totalorder %s28, 1
      %p88 = scmp.ne.s32.totalorder %s83, %s85
      %p89 = scmp.eq.s32.totalorder %s28, 0
      %p90 = por %p88, %p89
      %p91 = scmp.ne.s32.totalorder %s83, %s85
      %p92 = scmp.eq.s32.totalorder %s33, 1
      %p93 = por %p91, %p92
      %p94 = scmp.ne.s32.totalorder %s85, %s86
      %p95 = scmp.eq.s32.totalorder %s33, 0
      %p96 = por %p94, %p95
      %p97 = scmp.ne.s32.totalorder %s85, %s86
      %p98 = scmp.eq.s32.totalorder %s34, 1
      %p99 = por %p97, %p98
      %p101 = scmp.ne.s32.totalorder %s86, %s100
      %p102 = scmp.eq.s32.totalorder %s34, 0
      %p103 = por %p101, %p102
      %s105 = sadd.s32 %s104, 1
      %p108 = scmp.eq.s32.totalorder %s28, 1
      %p109 = scmp.ne.s32.totalorder %s104, %s106
      %p110 = scmp.eq.s32.totalorder %s28, 0
      %p111 = por %p109, %p110
      %p112 = scmp.ne.s32.totalorder %s104, %s106
      %p113 = scmp.eq.s32.totalorder %s33, 1
      %p114 = por %p112, %p113
      %p115 = scmp.ne.s32.totalorder %s106, %s107
      %p116 = scmp.eq.s32.totalorder %s33, 0
      %p117 = por %p115, %p116
      %p118 = scmp.ne.s32.totalorder %s106, %s107
      %p119 = scmp.eq.s32.totalorder %s34, 1
      %p120 = por %p118, %p119
      %p122 = scmp.ne.s32.totalorder %s107, %s121
      %p123 = scmp.eq.s32.totalorder %s34, 0
      %p124 = por %p122, %p123
      %s126 = sadd.s32 %s125, 1
      %p129 = scmp.eq.s32.totalorder %s28, 1
      %p130 = scmp.ne.s32.totalorder %s125, %s127
      %p131 = scmp.eq.s32.totalorder %s28, 0
      %p132 = por %p130, %p131
      %p133 = scmp.ne.s32.totalorder %s125, %s127
      %p134 = scmp.eq.s32.totalorder %s33, 1
      %p135 = por %p133, %p134
      %p136 = scmp.ne.s32.totalorder %s127, %s128
      %p137 = scmp.eq.s32.totalorder %s33, 0
      %p138 = por %p136, %p137
      %p139 = scmp.ne.s32.totalorder %s127, %s128
      %p140 = scmp.eq.s32.totalorder %s34, 1
      %p141 = por %p139, %p140
      %p143 = scmp.ne.s32.totalorder %s128, %s142
      %p144 = scmp.eq.s32.totalorder %s34, 0
      %p145 = por %p143, %p144
      %s147 = sadd.s32 %s146, 1
      %p150 = scmp.eq.s32.totalorder %s28, 1
      %p151 = scmp.ne.s32.totalorder %s146, %s148
      %p152 = scmp.eq.s32.totalorder %s28, 0
      %p153 = por %p151, %p152
      %p154 = scmp.ne.s32.totalorder %s146, %s148
      %p155 = scmp.eq.s32.totalorder %s33, 1
      %p156 = por %p154, %p155
      %p157 = scmp.ne.s32.totalorder %s148, %s149
      %p158 = scmp.eq.s32.totalorder %s33, 0
      %p159 = por %p157, %p158
      %p160 = scmp.ne.s32.totalorder %s148, %s149
      %p161 = scmp.eq.s32.totalorder %s34, 1
      %p162 = por %p160, %p161
      %p164 = scmp.ne.s32.totalorder %s149, %s163
      %p165 = scmp.eq.s32.totalorder %s34, 0
      %p166 = por %p164, %p165
      %s168 = sadd.s32 %s167, 1
      %p171 = scmp.eq.s32.totalorder %s28, 1
      %p172 = scmp.ne.s32.totalorder %s167, %s169
      %p173 = scmp.eq.s32.totalorder %s28, 0
      %p174 = por %p172, %p173
      %p175 = scmp.ne.s32.totalorder %s167, %s169
      %p176 = scmp.eq.s32.totalorder %s33, 1
      %p177 = por %p175, %p176
      %p178 = scmp.ne.s32.totalorder %s169, %s170
      %p179 = scmp.eq.s32.totalorder %s33, 0
      %p180 = por %p178, %p179
      %p181 = scmp.ne.s32.totalorder %s169, %s170
      %p182 = scmp.eq.s32.totalorder %s34, 1
      %p183 = por %p181, %p182
      %p185 = scmp.ne.s32.totalorder %s170, %s184
      %p186 = scmp.eq.s32.totalorder %s34, 0
      %p187 = por %p185, %p186
      %s189 = sadd.s32 %s188, 1
      %p192 = scmp.eq.s32.totalorder %s28, 1
      %p193 = scmp.ne.s32.totalorder %s188, %s190
      %p194 = scmp.eq.s32.totalorder %s28, 0
      %p195 = por %p193, %p194
      %p196 = scmp.ne.s32.totalorder %s188, %s190
      %p197 = scmp.eq.s32.totalorder %s33, 1
      %p198 = por %p196, %p197
      %p199 = scmp.ne.s32.totalorder %s190, %s191
      %p200 = scmp.eq.s32.totalorder %s33, 0
      %p201 = por %p199, %p200
      %p202 = scmp.ne.s32.totalorder %s190, %s191
      %p203 = scmp.eq.s32.totalorder %s34, 1
      %p204 = por %p202, %p203
      %p206 = scmp.ne.s32.totalorder %s191, %s205
      %p207 = scmp.eq.s32.totalorder %s34, 0
      %p208 = por %p206, %p207
      %s210 = sadd.s32 %s209, 1
      %p213 = scmp.eq.s32.totalorder %s28, 1
      %p214 = scmp.ne.s32.totalorder %s209, %s211
      %p215 = scmp.eq.s32.totalorder %s28, 0
      %p216 = por %p214, %p215
      %p217 = scmp.ne.s32.totalorder %s209, %s211
      %p218 = scmp.eq.s32.totalorder %s33, 1
      %p219 = por %p217, %p218
      %p220 = scmp.ne.s32.totalorder %s211, %s212
      %p221 = scmp.eq.s32.totalorder %s33, 0
      %p222 = por %p220, %p221
      %p223 = scmp.ne.s32.totalorder %s211, %s212
      %p224 = scmp.eq.s32.totalorder %s34, 1
      %p225 = por %p223, %p224
      %p227 = scmp.ne.s32.totalorder %s212, %s226
      %p228 = scmp.eq.s32.totalorder %s34, 0
      %p229 = por %p227, %p228
      %s231 = sadd.s32 %s230, 1
      %p234 = scmp.eq.s32.totalorder %s28, 1
      %p235 = scmp.ne.s32.totalorder %s230, %s232
      %p236 = scmp.eq.s32.totalorder %s28, 0
      %p237 = por %p235, %p236
      %p238 = scmp.ne.s32.totalorder %s230, %s232
      %p239 = scmp.eq.s32.totalorder %s33, 1
      %p240 = por %p238, %p239
      %p241 = scmp.ne.s32.totalorder %s232, %s233
      %p242 = scmp.eq.s32.totalorder %s33, 0
      %p243 = por %p241, %p242
      %p244 = scmp.ne.s32.totalorder %s232, %s233
      %p245 = scmp.eq.s32.totalorder %s34, 1
      %p246 = por %p244, %p245
      %p248 = scmp.ne.s32.totalorder %s233, %s247
      %p249 = scmp.eq.s32.totalorder %s34, 0
      %p250 = por %p248, %p249
      %s252 = sadd.s32 %s251, 1
      %p255 = scmp.eq.s32.totalorder %s28, 1
      %p256 = scmp.ne.s32.totalorder %s251, %s253
      %p257 = scmp.eq.s32.totalorder %s28, 0
      %p258 = por %p256, %p257
      %p259 = scmp.ne.s32.totalorder %s251, %s253
      %p260 = scmp.eq.s32.totalorder %s33, 1
      %p261 = por %p259, %p260
      %p262 = scmp.ne.s32.totalorder %s253, %s254
      %p263 = scmp.eq.s32.totalorder %s33, 0
      %p264 = por %p262, %p263
      %p265 = scmp.ne.s32.totalorder %s253, %s254
      %p266 = scmp.eq.s32.totalorder %s34, 1
      %p267 = por %p265, %p266
      %p269 = scmp.ne.s32.totalorder %s254, %s268
      %p270 = scmp.eq.s32.totalorder %s34, 0
      %p271 = por %p269, %p270
      %s273 = sadd.s32 %s272, 1
      %p276 = scmp.eq.s32.totalorder %s28, 1
      %p277 = scmp.ne.s32.totalorder %s272, %s274
      %p278 = scmp.eq.s32.totalorder %s28, 0
      %p279 = por %p277, %p278
      %p280 = scmp.ne.s32.totalorder %s272, %s274
      %p281 = scmp.eq.s32.totalorder %s33, 1
      %p282 = por %p280, %p281
      %p283 = scmp.ne.s32.totalorder %s274, %s275
      %p284 = scmp.eq.s32.totalorder %s33, 0
      %p285 = por %p283, %p284
      %p286 = scmp.ne.s32.totalorder %s274, %s275
      %p287 = scmp.eq.s32.totalorder %s34, 1
      %p288 = por %p286, %p287
      %p290 = scmp.ne.s32.totalorder %s275, %s289
      %p291 = scmp.eq.s32.totalorder %s34, 0
      %p292 = por %p290, %p291
      %s293 = ssub.s32 %s28, %s35
      %p294 = scmp.eq.s32.totalorder %s293, 0
      %s296 = sadd.s32 %s295, 1
      %s297 = scalar_select %p294, %s295, %s296
      %p300 = pneg %p294
      %p301 = scmp.eq.s32.totalorder %s28, 1
      %p302 = por %p300, %p301
      %p303 = scmp.ne.s32.totalorder %s295, %s298
      %p304 = scmp.eq.s32.totalorder %s28, 0
      %p305 = por %p303, %p304
      %p306 = scmp.ne.s32.totalorder %s295, %s298
      %p307 = scmp.eq.s32.totalorder %s33, 1
      %p308 = por %p306, %p307
      %p309 = scmp.ne.s32.totalorder %s298, %s299
      %p310 = scmp.eq.s32.totalorder %s33, 0
      %p311 = por %p309, %p310
      %p312 = scmp.ne.s32.totalorder %s298, %s299
      %p313 = scmp.eq.s32.totalorder %s34, 1
      %p314 = por %p312, %p313
      %p316 = scmp.ne.s32.totalorder %s299, %s315
      %p317 = scmp.eq.s32.totalorder %s34, 0
      %p318 = por %p316, %p317
      %p319 = scmp.le.s32.totalorder 1, %s28
      %p320 = scmp.lt.s32.totalorder %s28, 3
      %p321 = pnand %p319, %p320
      %p322 = pneg %p321
      // Predicated region
      $region9: #{tpu_custom_call.1} parent=5 // pred_check
        _
      $region10: #{tpu_custom_call.1} parent=5 // pred_check_branch
        %324 = sbr.rel (%p321) target = $region12
      $region11: #{tpu_custom_call.1} parent=5 // pred_region
        %s325 = ssub.s32 %s28, 1
        // Predicated region
        $region13: #{tpu_custom_call.1} parent=11 // pred_check
          %p326 = pneg %p75
        $region14: #{tpu_custom_call.1} parent=11 // pred_check_branch
          %328 = sbr.rel (%p326) target = $region16
        $region15: #{tpu_custom_call.1} parent=11 // pred_region
          %330 = vsyncadd [#allocation6], 0
          %s331 = sshll.u32 %s1, 4
          %s332 = int_to_ptr.hbm [resolvable:$true] %s331
          %s333 = sshll.u32 [#allocation5], 4
          %s334 = int_to_ptr.vmem [resolvable:$true] %s333
          %339 = dma.hbm_to_vmem [thread:$0]  %s332, 2048, %s334, [#allocation6], 64, 64, 4
        $region16: #{tpu_custom_call.1} parent=11 // pred_fallthru
          _
        // Predicated region
        $region17: #{tpu_custom_call.1} parent=11 // pred_check
          %p340 = pneg %p96
        $region18: #{tpu_custom_call.1} parent=11 // pred_check_branch
          %342 = sbr.rel (%p340) target = $region20
        $region19: #{tpu_custom_call.1} parent=11 // pred_region
          %344 = vsyncadd [#allocation6], 0
          %s345 = sshll.u32 %s2, 4
          %s346 = int_to_ptr.hbm [resolvable:$true] %s345
          %s347 = sshll.u32 [#allocation7], 4
          %s348 = int_to_ptr.vmem [resolvable:$true] %s347
          %353 = dma.hbm_to_vmem [thread:$0]  %s346, 16384, %s348, [#allocation6], 128, 128, 8
        $region20: #{tpu_custom_call.1} parent=11 // pred_fallthru
          _
        // Predicated region
        $region21: #{tpu_custom_call.1} parent=11 // pred_check
          %p354 = pneg %p117
        $region22: #{tpu_custom_call.1} parent=11 // pred_check_branch
          %356 = sbr.rel (%p354) target = $region24
        $region23: #{tpu_custom_call.1} parent=11 // pred_region
          %358 = vsyncadd [#allocation9], 0
          %s360 = sshll.u32 %s3, 4
          %s361 = int_to_ptr.hbm [resolvable:$true] %s360
          %s362 = sshll.u32 [#allocation8], 4
          %s363 = int_to_ptr.vmem [resolvable:$true] %s362
          %365 = dma.hbm_to_vmem [thread:$0]  %s361, 128, %s363, [#allocation9]
        $region24: #{tpu_custom_call.1} parent=11 // pred_fallthru
          _
        // Predicated region
        $region25: #{tpu_custom_call.1} parent=11 // pred_check
          %p366 = pneg %p138
        $region26: #{tpu_custom_call.1} parent=11 // pred_check_branch
          %368 = sbr.rel (%p366) target = $region28
        $region27: #{tpu_custom_call.1} parent=11 // pred_region
          %370 = vsyncadd [#allocation9], 0
          %s371 = sshll.u32 %s4, 4
          %s372 = int_to_ptr.hbm [resolvable:$true] %s371
          %s373 = sshll.u32 [#allocation10], 4
          %s374 = int_to_ptr.vmem [resolvable:$true] %s373
          %379 = dma.hbm_to_vmem [thread:$0]  %s372, 4096, %s374, [#allocation9], 64, 64, 4
        $region28: #{tpu_custom_call.1} parent=11 // pred_fallthru
          _
        // Predicated region
        $region29: #{tpu_custom_call.1} parent=11 // pred_check
          %p380 = pneg %p159
        $region30: #{tpu_custom_call.1} parent=11 // pred_check_branch
          %382 = sbr.rel (%p380) target = $region32
        $region31: #{tpu_custom_call.1} parent=11 // pred_region
          _
        $region32: #{tpu_custom_call.1} parent=11 // pred_fallthru
          _
        // Predicated region
        $region33: #{tpu_custom_call.1} parent=11 // pred_check
          %p383 = pneg %p180
        $region34: #{tpu_custom_call.1} parent=11 // pred_check_branch
          %385 = sbr.rel (%p383) target = $region36
        $region35: #{tpu_custom_call.1} parent=11 // pred_region
          %387 = vsyncadd [#allocation12], 0
          %s388 = sshll.u32 %s6, 4
          %s389 = int_to_ptr.hbm [resolvable:$true] %s388
          %s390 = sshll.u32 [#allocation11], 4
          %s391 = int_to_ptr.vmem [resolvable:$true] %s390
          %396 = dma.hbm_to_vmem [thread:$0]  %s389, 4096, %s391, [#allocation12], 64, 64, 4
        $region36: #{tpu_custom_call.1} parent=11 // pred_fallthru
          _
        // Predicated region
        $region37: #{tpu_custom_call.1} parent=11 // pred_check
          %p397 = pneg %p201
        $region38: #{tpu_custom_call.1} parent=11 // pred_check_branch
          %399 = sbr.rel (%p397) target = $region40
        $region39: #{tpu_custom_call.1} parent=11 // pred_region
          %401 = vsyncadd [#allocation12], 0
          %s403 = sshll.u32 %s7, 4
          %s404 = int_to_ptr.hbm [resolvable:$true] %s403
          %s405 = sshll.u32 [#allocation13], 4
          %s406 = int_to_ptr.vmem [resolvable:$true] %s405
          %408 = dma.hbm_to_vmem [thread:$0]  %s404, 64, %s406, [#allocation12]
        $region40: #{tpu_custom_call.1} parent=11 // pred_fallthru
          _
        // Predicated region
        $region41: #{tpu_custom_call.1} parent=11 // pred_check
          %p409 = pneg %p222
        $region42: #{tpu_custom_call.1} parent=11 // pred_check_branch
          %411 = sbr.rel (%p409) target = $region44
        $region43: #{tpu_custom_call.1} parent=11 // pred_region
          %413 = vsyncadd [#allocation15], 0
          %s414 = sshll.u32 %s8, 4
          %s415 = int_to_ptr.hbm [resolvable:$true] %s414
          %s416 = sshll.u32 [#allocation14], 4
          %s417 = int_to_ptr.vmem [resolvable:$true] %s416
          %422 = dma.hbm_to_vmem [thread:$0]  %s415, 1024, %s417, [#allocation15], 64, 64, 4
        $region44: #{tpu_custom_call.1} parent=11 // pred_fallthru
          _
        // Predicated region
        $region45: #{tpu_custom_call.1} parent=11 // pred_check
          %p423 = pneg %p243
        $region46: #{tpu_custom_call.1} parent=11 // pred_check_branch
          %425 = sbr.rel (%p423) target = $region48
        $region47: #{tpu_custom_call.1} parent=11 // pred_region
          _
        $region48: #{tpu_custom_call.1} parent=11 // pred_fallthru
          _
        // Predicated region
        $region49: #{tpu_custom_call.1} parent=11 // pred_check
          %p426 = pneg %p264
        $region50: #{tpu_custom_call.1} parent=11 // pred_check_branch
          %428 = sbr.rel (%p426) target = $region52
        $region51: #{tpu_custom_call.1} parent=11 // pred_region
          %430 = vsyncadd [#allocation15], 0
          %s431 = sshll.u32 %s10, 4
          %s432 = int_to_ptr.hbm [resolvable:$true] %s431
          %s433 = sshll.u32 [#allocation16], 4
          %s434 = int_to_ptr.vmem [resolvable:$true] %s433
          %439 = dma.hbm_to_vmem [thread:$0]  %s432, 1024, %s434, [#allocation15], 64, 64, 4
        $region52: #{tpu_custom_call.1} parent=11 // pred_fallthru
          _
        // Predicated region
        $region53: #{tpu_custom_call.1} parent=11 // pred_check
          %p440 = pneg %p285
        $region54: #{tpu_custom_call.1} parent=11 // pred_check_branch
          %442 = sbr.rel (%p440) target = $region56
        $region55: #{tpu_custom_call.1} parent=11 // pred_region
          _
        $region56: #{tpu_custom_call.1} parent=11 // pred_fallthru
          _
      $region12: #{tpu_custom_call.1} parent=5 // pred_fallthru
        _
      %p443 = scmp.lt.s32.totalorder %s28, 2
      // Predicated region
      $region57: #{tpu_custom_call.1} parent=5 // pred_check
        %p444 = pneg %p443
      $region58: #{tpu_custom_call.1} parent=5 // pred_check_branch
        %446 = sbr.rel (%p444) target = $region60
      $region59: #{tpu_custom_call.1} parent=5 // pred_region
        // Predicated region
        $region61: #{tpu_custom_call.1} parent=59 // pred_check
          %p447 = pneg %p48
        $region62: #{tpu_custom_call.1} parent=59 // pred_check_branch
          %449 = sbr.rel (%p447) target = $region64
        $region63: #{tpu_custom_call.1} parent=59 // pred_region
          %s450 = sand.u32 %s38, 1
          %s451 = scalar_lea.sflag [#allocation3], %s450
          %s452 = sand.u32 %s38, 1
          %s453 = smul.addr %s452, 8
          %s454 = scalar_lea.vmem [#allocation2], %s453
          %456 = vsyncadd %s451, 0
          %s457 = smul.addr %s28, 2
          %s458 = smul.addr %s457, 4
          %s459 = scalar_lea.hbm %s0, %s458
          %s460 = sshll.u32 %s459, 4
          %s461 = int_to_ptr.hbm [resolvable:$true] %s460
          %s462 = sshll.u32 %s454, 4
          %s463 = int_to_ptr.vmem [resolvable:$true] %s462
          %468 = dma.hbm_to_vmem [thread:$0]  %s461, 128, %s463, %s451, 64, 64, 4
        $region64: #{tpu_custom_call.1} parent=59 // pred_fallthru
          _
      $region60: #{tpu_custom_call.1} parent=5 // pred_fallthru
        _
      %p469 = scmp.le.s32.totalorder 1, %s28
      %p470 = scmp.lt.s32.totalorder %s28, 3
      %p471 = pnand %p469, %p470
      %p472 = pneg %p471
      // Predicated region
      $region65: #{tpu_custom_call.1} parent=5 // pred_check
        _
      $region66: #{tpu_custom_call.1} parent=5 // pred_check_branch
        %474 = sbr.rel (%p471) target = $region68
      $region67: #{tpu_custom_call.1} parent=5 // pred_region
        %s475 = ssub.s32 %s28, 1
        %s476 = sand.u32 %s41, 1
        %s477 = scalar_lea.sflag [#allocation3], %s476
        %s478 = sand.u32 %s41, 1
        %s479 = smul.addr %s478, 8
        %s480 = scalar_lea.vmem [#allocation2], %s479
        // Predicated region
        $region69: #{tpu_custom_call.1} parent=67 // pred_check
          %p481 = pneg %p54
        $region70: #{tpu_custom_call.1} parent=67 // pred_check_branch
          %483 = sbr.rel (%p481) target = $region72
        $region71: #{tpu_custom_call.1} parent=67 // pred_region
          %485 = dma.done %s477, 128
        $region72: #{tpu_custom_call.1} parent=67 // pred_fallthru
          _
        // Predicated region
        $region73: #{tpu_custom_call.1} parent=67 // pred_check
          %p486 = pneg %p75
        $region74: #{tpu_custom_call.1} parent=67 // pred_check_branch
          %488 = sbr.rel (%p486) target = $region76
        $region75: #{tpu_custom_call.1} parent=67 // pred_region
          %490 = dma.done [#allocation6], 2048
        $region76: #{tpu_custom_call.1} parent=67 // pred_fallthru
          _
        // Predicated region
        $region77: #{tpu_custom_call.1} parent=67 // pred_check
          %p491 = pneg %p96
        $region78: #{tpu_custom_call.1} parent=67 // pred_check_branch
          %493 = sbr.rel (%p491) target = $region80
        $region79: #{tpu_custom_call.1} parent=67 // pred_region
          %495 = dma.done [#allocation6], 16384
        $region80: #{tpu_custom_call.1} parent=67 // pred_fallthru
          _
        // Predicated region
        $region81: #{tpu_custom_call.1} parent=67 // pred_check
          %p496 = pneg %p117
        $region82: #{tpu_custom_call.1} parent=67 // pred_check_branch
          %498 = sbr.rel (%p496) target = $region84
        $region83: #{tpu_custom_call.1} parent=67 // pred_region
          %500 = dma.done [#allocation9], 128
        $region84: #{tpu_custom_call.1} parent=67 // pred_fallthru
          _
        // Predicated region
        $region85: #{tpu_custom_call.1} parent=67 // pred_check
          %p501 = pneg %p138
        $region86: #{tpu_custom_call.1} parent=67 // pred_check_branch
          %503 = sbr.rel (%p501) target = $region88
        $region87: #{tpu_custom_call.1} parent=67 // pred_region
          %505 = dma.done [#allocation9], 4096
        $region88: #{tpu_custom_call.1} parent=67 // pred_fallthru
          _
        // Predicated region
        $region89: #{tpu_custom_call.1} parent=67 // pred_check
          %p506 = pneg %p180
        $region90: #{tpu_custom_call.1} parent=67 // pred_check_branch
          %508 = sbr.rel (%p506) target = $region92
        $region91: #{tpu_custom_call.1} parent=67 // pred_region
          %510 = dma.done [#allocation12], 4096
        $region92: #{tpu_custom_call.1} parent=67 // pred_fallthru
          _
        // Predicated region
        $region93: #{tpu_custom_call.1} parent=67 // pred_check
          %p511 = pneg %p201
        $region94: #{tpu_custom_call.1} parent=67 // pred_check_branch
          %513 = sbr.rel (%p511) target = $region96
        $region95: #{tpu_custom_call.1} parent=67 // pred_region
          %515 = dma.done [#allocation12], 64
        $region96: #{tpu_custom_call.1} parent=67 // pred_fallthru
          _
        // Predicated region
        $region97: #{tpu_custom_call.1} parent=67 // pred_check
          %p516 = pneg %p222
        $region98: #{tpu_custom_call.1} parent=67 // pred_check_branch
          %518 = sbr.rel (%p516) target = $region100
        $region99: #{tpu_custom_call.1} parent=67 // pred_region
          %520 = dma.done [#allocation15], 1024
        $region100: #{tpu_custom_call.1} parent=67 // pred_fallthru
          _
        // Predicated region
        $region101: #{tpu_custom_call.1} parent=67 // pred_check
          %p521 = pneg %p264
        $region102: #{tpu_custom_call.1} parent=67 // pred_check_branch
          %523 = sbr.rel (%p521) target = $region104
        $region103: #{tpu_custom_call.1} parent=67 // pred_region
          %525 = dma.done [#allocation15], 1024
        $region104: #{tpu_custom_call.1} parent=67 // pred_fallthru
          _
        %s526 = sand.u32 %s41, 1
        %s527 = scalar_lea.sflag [#allocation3], %s526
        %s528 = sand.u32 %s41, 1
        %s529 = smul.addr %s528, 8
        %s530 = scalar_lea.vmem [#allocation2], %s529
        %p531 = pneg %p54
        %p532 = pneg %p51
        %p533 = pneg %p75
        %p534 = pneg %p72
        %p535 = pneg %p96
        %p536 = pneg %p93
        %p537 = pneg %p117
        %p538 = pneg %p114
        %p539 = pneg %p138
        %p540 = pneg %p135
        %p541 = pneg %p159
        %p542 = pneg %p156
        %p543 = pneg %p180
        %p544 = pneg %p177
        %p545 = pneg %p201
        %p546 = pneg %p198
        %p547 = pneg %p222
        %p548 = pneg %p219
        %p549 = pneg %p243
        %p550 = pneg %p240
        %p551 = pneg %p264
        %p552 = pneg %p261
        %p553 = pneg %p285
        %p554 = pneg %p282
        %p555 = pneg %p311
        %p556 = pneg %p308
        %s557 = sand.u32 %s298, 1
        %s558 = scalar_lea.sflag [#allocation4], %s557
        %s559 = sand.u32 %s298, 1
        %s560 = smul.addr %s559, 4
        %s561 = scalar_lea.vmem [#allocation17], %s560
        %v562 = vld [vmem:[%s480] sm:$0xf]
        %v563 = vld [vmem:[%s480 + $0x4] sm:$0xf]
        %v564 = vld [vmem:[#allocation5] sm:$0xf]
        %v565 = vld [vmem:[#allocation5 + $0x4] sm:$0xf]
        %v566 = vld [vmem:[#allocation5 + $0x8] sm:$0xf]
        %v567 = vld [vmem:[#allocation5 + $0xc] sm:$0xf]
        %v568 = vld [vmem:[#allocation5 + $0x10] sm:$0xf]
        %v569 = vld [vmem:[#allocation5 + $0x14] sm:$0xf]
        %v570 = vld [vmem:[#allocation5 + $0x18] sm:$0xf]
        %v571 = vld [vmem:[#allocation5 + $0x1c] sm:$0xf]
        %v572 = vld [vmem:[#allocation5 + $0x20] sm:$0xf]
        %v573 = vld [vmem:[#allocation5 + $0x24] sm:$0xf]
        %v574 = vld [vmem:[#allocation5 + $0x28] sm:$0xf]
        %v575 = vld [vmem:[#allocation5 + $0x2c] sm:$0xf]
        %v576 = vld [vmem:[#allocation5 + $0x30] sm:$0xf]
        %v577 = vld [vmem:[#allocation5 + $0x34] sm:$0xf]
        %v578 = vld [vmem:[#allocation5 + $0x38] sm:$0xf]
        %v579 = vld [vmem:[#allocation5 + $0x3c] sm:$0xf]
        %v582 = vunpack.c.l.b16 %v562
        %v583 = vunpack.c.l.b16 %v563
        %v584 = vpack.c.b16 %v583, %v582
        %v602 = vunpack.c.l.b16 %v564
        %v603 = vunpack.c.l.b16 %v565
        %v604 = vunpack.c.l.b16 %v566
        %v605 = vunpack.c.l.b16 %v567
        %v606 = vunpack.c.l.b16 %v568
        %v607 = vunpack.c.l.b16 %v569
        %v608 = vunpack.c.l.b16 %v570
        %v609 = vunpack.c.l.b16 %v571
        %v610 = vunpack.c.l.b16 %v572
        %v611 = vunpack.c.l.b16 %v573
        %v612 = vunpack.c.l.b16 %v574
        %v613 = vunpack.c.l.b16 %v575
        %v614 = vunpack.c.l.b16 %v576
        %v615 = vunpack.c.l.b16 %v577
        %v616 = vunpack.c.l.b16 %v578
        %v617 = vunpack.c.l.b16 %v579
        %v618 = vpack.c.b16 %v603, %v602
        %v619 = vpack.c.b16 %v605, %v604
        %v620 = vpack.c.b16 %v607, %v606
        %v621 = vpack.c.b16 %v609, %v608
        %v622 = vpack.c.b16 %v611, %v610
        %v623 = vpack.c.b16 %v613, %v612
        %v624 = vpack.c.b16 %v615, %v614
        %v625 = vpack.c.b16 %v617, %v616
        %634 = vmatpush.bf16.msra.mxu0 %v625
        %635 = vmatpush.bf16.msra.mxu0 %v624
        %636 = vmatpush.bf16.msra.mxu0 %v623
        %637 = vmatpush.bf16.msra.mxu0 %v622
        %638 = vmatpush.bf16.msra.mxu0 %v621
        %639 = vmatpush.bf16.msra.mxu0 %v620
        %640 = vmatpush.bf16.msra.mxu0 %v619
        %641 = vmatpush.bf16.msra.mxu0 %v618
        %642 = vmatmul.bf16.gmra.mxu0 %v584
        %v643 = vpop.f32.mrf.mxu0
        %v644 = vadd.f32 0.0, %v643
        %v645 = vpop.f32.mrf.mxu0
        %v646 = vadd.f32 0.0, %v645
        %647 = vdwg.mxu0
        %s648 = scalar_lea.vmem [#allocation5], 64
        %v649 = vld [vmem:[%s648] sm:$0xf]
        %v650 = vld [vmem:[%s648 + $0x4] sm:$0xf]
        %v651 = vld [vmem:[%s648 + $0x8] sm:$0xf]
        %v652 = vld [vmem:[%s648 + $0xc] sm:$0xf]
        %v653 = vld [vmem:[%s648 + $0x10] sm:$0xf]
        %v654 = vld [vmem:[%s648 + $0x14] sm:$0xf]
        %v655 = vld [vmem:[%s648 + $0x18] sm:$0xf]
        %v656 = vld [vmem:[%s648 + $0x1c] sm:$0xf]
        %v657 = vld [vmem:[%s648 + $0x20] sm:$0xf]
        %v658 = vld [vmem:[%s648 + $0x24] sm:$0xf]
        %v659 = vld [vmem:[%s648 + $0x28] sm:$0xf]
        %v660 = vld [vmem:[%s648 + $0x2c] sm:$0xf]
        %v661 = vld [vmem:[%s648 + $0x30] sm:$0xf]
        %v662 = vld [vmem:[%s648 + $0x34] sm:$0xf]
        %v663 = vld [vmem:[%s648 + $0x38] sm:$0xf]
        %v664 = vld [vmem:[%s648 + $0x3c] sm:$0xf]
        %v681 = vunpack.c.l.b16 %v649
        %v682 = vunpack.c.l.b16 %v650
        %v683 = vunpack.c.l.b16 %v651
        %v684 = vunpack.c.l.b16 %v652
        %v685 = vunpack.c.l.b16 %v653
        %v686 = vunpack.c.l.b16 %v654
        %v687 = vunpack.c.l.b16 %v655
        %v688 = vunpack.c.l.b16 %v656
        %v689 = vunpack.c.l.b16 %v657
        %v690 = vunpack.c.l.b16 %v658
        %v691 = vunpack.c.l.b16 %v659
        %v692 = vunpack.c.l.b16 %v660
        %v693 = vunpack.c.l.b16 %v661
        %v694 = vunpack.c.l.b16 %v662
        %v695 = vunpack.c.l.b16 %v663
        %v696 = vunpack.c.l.b16 %v664
        %v697 = vpack.c.b16 %v682, %v681
        %v698 = vpack.c.b16 %v684, %v683
        %v699 = vpack.c.b16 %v686, %v685
        %v700 = vpack.c.b16 %v688, %v687
        %v701 = vpack.c.b16 %v690, %v689
        %v702 = vpack.c.b16 %v692, %v691
        %v703 = vpack.c.b16 %v694, %v693
        %v704 = vpack.c.b16 %v696, %v695
        %713 = vmatpush.bf16.msra.mxu0 %v704
        %714 = vmatpush.bf16.msra.mxu0 %v703
        %715 = vmatpush.bf16.msra.mxu0 %v702
        %716 = vmatpush.bf16.msra.mxu0 %v701
        %717 = vmatpush.bf16.msra.mxu0 %v700
        %718 = vmatpush.bf16.msra.mxu0 %v699
        %719 = vmatpush.bf16.msra.mxu0 %v698
        %720 = vmatpush.bf16.msra.mxu0 %v697
        %721 = vmatmul.bf16.gmra.mxu0 %v584
        %v722 = vpop.f32.mrf.mxu0
        %v723 = vadd.f32 0.0, %v722
        %v724 = vpop.f32.mrf.mxu0
        %v725 = vadd.f32 0.0, %v724
        %726 = vdwg.mxu0
        %vm729 = vcmask 1046528
        %v730 = vrot.slane %v723, 1
        %v731 = vrot.slane %v725, 1
        %v732 = vsel %vm729, %v730, %v731
        %v735 = vadd.f32 %v644, %v732
        %v736 = vadd.f32 %v646, %v731
        %v737 = vpack.c.bf16 %v735, %v735
        %v738 = vpack.c.bf16 %v736, %v736
        %s739 = scalar_lea.vmem [#allocation7], 128
        %v740 = vld [vmem:[%s739] sm:$0xff]
        %v741 = vld [vmem:[%s739 + $0x8] sm:$0xff]
        %v742 = vld [vmem:[%s739 + $0x10] sm:$0xff]
        %v743 = vld [vmem:[%s739 + $0x18] sm:$0xff]
        %v744 = vld [vmem:[%s739 + $0x20] sm:$0xff]
        %v745 = vld [vmem:[%s739 + $0x28] sm:$0xff]
        %v746 = vld [vmem:[%s739 + $0x30] sm:$0xff]
        %v747 = vld [vmem:[%s739 + $0x38] sm:$0xff]
        %v748 = vld [vmem:[%s739 + $0x40] sm:$0xff]
        %v749 = vld [vmem:[%s739 + $0x48] sm:$0xff]
        %v750 = vld [vmem:[%s739 + $0x50] sm:$0xff]
        %v751 = vld [vmem:[%s739 + $0x58] sm:$0xff]
        %v752 = vld [vmem:[%s739 + $0x60] sm:$0xff]
        %v753 = vld [vmem:[%s739 + $0x68] sm:$0xff]
        %v754 = vld [vmem:[%s739 + $0x70] sm:$0xff]
        %v755 = vld [vmem:[%s739 + $0x78] sm:$0xff]
        %v756 = vld [vmem:[#allocation8] ss:$4 sm:$0x3]
        %v758 = vperm.slane %v756, 0
        %v759 = vperm.slane %v756, 1
        %v764 = vunpack.c.l.b16 %v737
        %v765 = vunpack.c.l.b16 %v738
        %v766 = vpack.c.b16 %v765, %v764
        %v784 = vunpack.c.l.b16 %v740
        %v785 = vunpack.c.h.b16 %v740
        %v786 = vunpack.c.l.b16 %v741
        %v787 = vunpack.c.h.b16 %v741
        %v788 = vunpack.c.l.b16 %v742
        %v789 = vunpack.c.h.b16 %v742
        %v790 = vunpack.c.l.b16 %v743
        %v791 = vunpack.c.h.b16 %v743
        %v792 = vunpack.c.l.b16 %v744
        %v793 = vunpack.c.h.b16 %v744
        %v794 = vunpack.c.l.b16 %v745
        %v795 = vunpack.c.h.b16 %v745
        %v796 = vunpack.c.l.b16 %v746
        %v797 = vunpack.c.h.b16 %v746
        %v798 = vunpack.c.l.b16 %v747
        %v799 = vunpack.c.h.b16 %v747
        %v800 = vunpack.c.l.b16 %v748
        %v801 = vunpack.c.h.b16 %v748
        %v802 = vunpack.c.l.b16 %v749
        %v803 = vunpack.c.h.b16 %v749
        %v804 = vunpack.c.l.b16 %v750
        %v805 = vunpack.c.h.b16 %v750
        %v806 = vunpack.c.l.b16 %v751
        %v807 = vunpack.c.h.b16 %v751
        %v808 = vunpack.c.l.b16 %v752
        %v809 = vunpack.c.h.b16 %v752
        %v810 = vunpack.c.l.b16 %v753
        %v811 = vunpack.c.h.b16 %v753
        %v812 = vunpack.c.l.b16 %v754
        %v813 = vunpack.c.h.b16 %v754
        %v814 = vunpack.c.l.b16 %v755
        %v815 = vunpack.c.h.b16 %v755
        %v816 = vpack.c.b16 %v786, %v784
        %v817 = vpack.c.b16 %v787, %v785
        %v818 = vpack.c.b16 %v790, %v788
        %v819 = vpack.c.b16 %v791, %v789
        %v820 = vpack.c.b16 %v794, %v792
        %v821 = vpack.c.b16 %v795, %v793
        %v822 = vpack.c.b16 %v798, %v796
        %v823 = vpack.c.b16 %v799, %v797
        %v824 = vpack.c.b16 %v802, %v800
        %v825 = vpack.c.b16 %v803, %v801
        %v826 = vpack.c.b16 %v806, %v804
        %v827 = vpack.c.b16 %v807, %v805
        %v828 = vpack.c.b16 %v810, %v808
        %v829 = vpack.c.b16 %v811, %v809
        %v830 = vpack.c.b16 %v814, %v812
        %v831 = vpack.c.b16 %v815, %v813
        %848 = vmatpush.bf16.msra.mxu0 %v830
        %849 = vmatpush.bf16.msra.mxu0 %v828
        %850 = vmatpush.bf16.msra.mxu0 %v826
        %851 = vmatpush.bf16.msra.mxu0 %v824
        %852 = vmatpush.bf16.msra.mxu0 %v822
        %853 = vmatpush.bf16.msra.mxu0 %v820
        %854 = vmatpush.bf16.msra.mxu0 %v818
        %855 = vmatpush.bf16.msra.mxu0 %v816
        %856 = vmatmul.bf16.gmra.mxu0 %v766
        %v857 = vpop.f32.mrf.mxu0
        %v858 = vadd.f32 %v758, %v857
        %v859 = vpop.f32.mrf.mxu0
        %v860 = vadd.f32 %v758, %v859
        %861 = vdwg.mxu0
        %862 = vmatpush.bf16.msra.mxu0 %v831
        %863 = vmatpush.bf16.msra.mxu0 %v829
        %864 = vmatpush.bf16.msra.mxu0 %v827
        %865 = vmatpush.bf16.msra.mxu0 %v825
        %866 = vmatpush.bf16.msra.mxu0 %v823
        %867 = vmatpush.bf16.msra.mxu0 %v821
        %868 = vmatpush.bf16.msra.mxu0 %v819
        %869 = vmatpush.bf16.msra.mxu0 %v817
        %870 = vmatmul.bf16.gmra.mxu0 %v766
        %v871 = vpop.f32.mrf.mxu0
        %v872 = vadd.f32 %v759, %v871
        %v873 = vpop.f32.mrf.mxu0
        %v874 = vadd.f32 %v759, %v873
        %875 = vdwg.mxu0
        %v876 = vld [vmem:[#allocation7] sm:$0xff]
        %v877 = vld [vmem:[#allocation7 + $0x8] sm:$0xff]
        %v878 = vld [vmem:[#allocation7 + $0x10] sm:$0xff]
        %v879 = vld [vmem:[#allocation7 + $0x18] sm:$0xff]
        %v880 = vld [vmem:[#allocation7 + $0x20] sm:$0xff]
        %v881 = vld [vmem:[#allocation7 + $0x28] sm:$0xff]
        %v882 = vld [vmem:[#allocation7 + $0x30] sm:$0xff]
        %v883 = vld [vmem:[#allocation7 + $0x38] sm:$0xff]
        %v884 = vld [vmem:[#allocation7 + $0x40] sm:$0xff]
        %v885 = vld [vmem:[#allocation7 + $0x48] sm:$0xff]
        %v886 = vld [vmem:[#allocation7 + $0x50] sm:$0xff]
        %v887 = vld [vmem:[#allocation7 + $0x58] sm:$0xff]
        %v888 = vld [vmem:[#allocation7 + $0x60] sm:$0xff]
        %v889 = vld [vmem:[#allocation7 + $0x68] sm:$0xff]
        %v890 = vld [vmem:[#allocation7 + $0x70] sm:$0xff]
        %v891 = vld [vmem:[#allocation7 + $0x78] sm:$0xff]
        %v908 = vunpack.c.l.b16 %v876
        %v909 = vunpack.c.h.b16 %v876
        %v910 = vunpack.c.l.b16 %v877
        %v911 = vunpack.c.h.b16 %v877
        %v912 = vunpack.c.l.b16 %v878
        %v913 = vunpack.c.h.b16 %v878
        %v914 = vunpack.c.l.b16 %v879
        %v915 = vunpack.c.h.b16 %v879
        %v916 = vunpack.c.l.b16 %v880
        %v917 = vunpack.c.h.b16 %v880
        %v918 = vunpack.c.l.b16 %v881
        %v919 = vunpack.c.h.b16 %v881
        %v920 = vunpack.c.l.b16 %v882
        %v921 = vunpack.c.h.b16 %v882
        %v922 = vunpack.c.l.b16 %v883
        %v923 = vunpack.c.h.b16 %v883
        %v924 = vunpack.c.l.b16 %v884
        %v925 = vunpack.c.h.b16 %v884
        %v926 = vunpack.c.l.b16 %v885
        %v927 = vunpack.c.h.b16 %v885
        %v928 = vunpack.c.l.b16 %v886
        %v929 = vunpack.c.h.b16 %v886
        %v930 = vunpack.c.l.b16 %v887
        %v931 = vunpack.c.h.b16 %v887
        %v932 = vunpack.c.l.b16 %v888
        %v933 = vunpack.c.h.b16 %v888
        %v934 = vunpack.c.l.b16 %v889
        %v935 = vunpack.c.h.b16 %v889
        %v936 = vunpack.c.l.b16 %v890
        %v937 = vunpack.c.h.b16 %v890
        %v938 = vunpack.c.l.b16 %v891
        %v939 = vunpack.c.h.b16 %v891
        %v940 = vpack.c.b16 %v910, %v908
        %v941 = vpack.c.b16 %v911, %v909
        %v942 = vpack.c.b16 %v914, %v912
        %v943 = vpack.c.b16 %v915, %v913
        %v944 = vpack.c.b16 %v918, %v916
        %v945 = vpack.c.b16 %v919, %v917
        %v946 = vpack.c.b16 %v922, %v920
        %v947 = vpack.c.b16 %v923, %v921
        %v948 = vpack.c.b16 %v926, %v924
        %v949 = vpack.c.b16 %v927, %v925
        %v950 = vpack.c.b16 %v930, %v928
        %v951 = vpack.c.b16 %v931, %v929
        %v952 = vpack.c.b16 %v934, %v932
        %v953 = vpack.c.b16 %v935, %v933
        %v954 = vpack.c.b16 %v938, %v936
        %v955 = vpack.c.b16 %v939, %v937
        %972 = vmatpush.bf16.msra.mxu0 %v954
        %973 = vmatpush.bf16.msra.mxu0 %v952
        %974 = vmatpush.bf16.msra.mxu0 %v950
        %975 = vmatpush.bf16.msra.mxu0 %v948
        %976 = vmatpush.bf16.msra.mxu0 %v946
        %977 = vmatpush.bf16.msra.mxu0 %v944
        %978 = vmatpush.bf16.msra.mxu0 %v942
        %979 = vmatpush.bf16.msra.mxu0 %v940
        %980 = vmatmul.bf16.gmra.mxu0 %v766
        %v981 = vpop.f32.mrf.mxu0
        %v982 = vadd.f32 0.0, %v981
        %v983 = vpop.f32.mrf.mxu0
        %v984 = vadd.f32 0.0, %v983
        %985 = vdwg.mxu0
        %986 = vmatpush.bf16.msra.mxu0 %v955
        %987 = vmatpush.bf16.msra.mxu0 %v953
        %988 = vmatpush.bf16.msra.mxu0 %v951
        %989 = vmatpush.bf16.msra.mxu0 %v949
        %990 = vmatpush.bf16.msra.mxu0 %v947
        %991 = vmatpush.bf16.msra.mxu0 %v945
        %992 = vmatpush.bf16.msra.mxu0 %v943
        %993 = vmatpush.bf16.msra.mxu0 %v941
        %994 = vmatmul.bf16.gmra.mxu0 %v766
        %v995 = vpop.f32.mrf.mxu0
        %v996 = vadd.f32 0.0, %v995
        %v997 = vpop.f32.mrf.mxu0
        %v998 = vadd.f32 0.0, %v997
        %999 = vdwg.mxu0
        %vm1004 = vcmask 1040384
        %v1005 = vrot.slane %v982, 7
        %v1006 = vrot.slane %v996, 7
        %v1007 = vrot.slane %v984, 7
        %v1008 = vsel %vm1004, %v1005, %v1007
        %v1009 = vrot.slane %v998, 7
        %v1010 = vsel %vm1004, %v1006, %v1009
        %v1015 = vadd.f32 %v858, %v1005
        %v1016 = vadd.f32 %v872, %v1006
        %v1017 = vadd.f32 %v860, %v1008
        %v1018 = vadd.f32 %v874, %v1010
        %v1019 = vsel %vm1004, %v858, %v1015
        %v1020 = vsel %vm1004, %v872, %v1016
        %v1021 = vtanh.pop %v1019
        %v1022 = vtanh.pop %v1017
        %v1023 = vxor.u32 %v1020, 2147483648
        %v1024 = vxor.u32 %v1018, 2147483648
        %v1025 = vmul.f32 %v1023, 1.442695
        %v1026 = vpow.pop %v1025
        %v1027 = vmul.f32 %v1024, 1.442695
        %v1028 = vpow.pop %v1027
        %v1029 = vadd.f32 %v1026, 1.0
        %v1030 = vadd.f32 %v1028, 1.0
        %v1031 = vrcp.pop %v1029
        %v1032 = vmul.f32 %v1029, %v1031
        %v1033 = vsub.f32 1.0, %v1032
        %v1034 = vmul.f32 %v1031, %v1033
        %v1035 = vadd.f32 %v1031, %v1034
        %vm1036 = vweird.f32 %v1029
        %vm1037 = vweird.f32 %v1031
        %vm1038 = vmor %vm1036, %vm1037
        %v1039 = vsel %vm1038, %v1031, %v1035
        %v1040 = vand.u32 2147483647, %v1029
        %vm1041 = vcmp.eq.f32.partialorder %v1040, 8.507059e+37
        %v1042 = vand.u32 %v1029, 2147483648
        %v1043 = vor.u32 1.1754944e-38, %v1042
        %v1044 = vsel %vm1041, %v1043, %v1039
        %v1045 = vmul.f32 1.0, %v1044
        %v1046 = vrcp.pop %v1030
        %v1047 = vmul.f32 %v1030, %v1046
        %v1048 = vsub.f32 1.0, %v1047
        %v1049 = vmul.f32 %v1046, %v1048
        %v1050 = vadd.f32 %v1046, %v1049
        %vm1051 = vweird.f32 %v1030
        %vm1052 = vweird.f32 %v1046
        %vm1053 = vmor %vm1051, %vm1052
        %v1054 = vsel %vm1053, %v1046, %v1050
        %v1055 = vand.u32 2147483647, %v1030
        %vm1056 = vcmp.eq.f32.partialorder %v1055, 8.507059e+37
        %v1057 = vand.u32 %v1030, 2147483648
        %v1058 = vor.u32 1.1754944e-38, %v1057
        %v1059 = vsel %vm1056, %v1058, %v1054
        %v1060 = vmul.f32 1.0, %v1059
        %v1061 = vmul.f32 %v1021, %v1045
        %v1062 = vmul.f32 %v1022, %v1060
        %v1063 = vpack.c.bf16 %v1061, %v1061
        %v1064 = vpack.c.bf16 %v1062, %v1062
        %v1065 = vld [vmem:[#allocation11] sm:$0xf]
        %v1066 = vld [vmem:[#allocation11 + $0x4] sm:$0xf]
        %v1067 = vld [vmem:[#allocation11 + $0x8] sm:$0xf]
        %v1068 = vld [vmem:[#allocation11 + $0xc] sm:$0xf]
        %v1069 = vld [vmem:[#allocation11 + $0x10] sm:$0xf]
        %v1070 = vld [vmem:[#allocation11 + $0x14] sm:$0xf]
        %v1071 = vld [vmem:[#allocation11 + $0x18] sm:$0xf]
        %v1072 = vld [vmem:[#allocation11 + $0x1c] sm:$0xf]
        %v1073 = vld [vmem:[#allocation11 + $0x20] sm:$0xf]
        %v1074 = vld [vmem:[#allocation11 + $0x24] sm:$0xf]
        %v1075 = vld [vmem:[#allocation11 + $0x28] sm:$0xf]
        %v1076 = vld [vmem:[#allocation11 + $0x2c] sm:$0xf]
        %v1077 = vld [vmem:[#allocation11 + $0x30] sm:$0xf]
        %v1078 = vld [vmem:[#allocation11 + $0x34] sm:$0xf]
        %v1079 = vld [vmem:[#allocation11 + $0x38] sm:$0xf]
        %v1080 = vld [vmem:[#allocation11 + $0x3c] sm:$0xf]
        %v1081 = vld [vmem:[#allocation13] sm:$0x1]
        %v1082 = vperm.slane %v1081, 0
        %v1084 = vunpack.c.l.b16 %v1064
        %v1085 = vpack.c.b16 %v1084, %v1084
        %v1087 = vshrl.u32 %v1085, 16
        %v1089 = vrot.slane %v1087, 1
        %v1090 = vshll.u32 %v1085, 16
        %v1092 = vrot.slane %v1090, 2
        %v1093 = vor.u32 %v1089, %v1092
        %v1111 = vunpack.c.l.b16 %v1065
        %v1112 = vunpack.c.l.b16 %v1066
        %v1113 = vunpack.c.l.b16 %v1067
        %v1114 = vunpack.c.l.b16 %v1068
        %v1115 = vunpack.c.l.b16 %v1069
        %v1116 = vunpack.c.l.b16 %v1070
        %v1117 = vunpack.c.l.b16 %v1071
        %v1118 = vunpack.c.l.b16 %v1072
        %v1119 = vunpack.c.l.b16 %v1073
        %v1120 = vunpack.c.l.b16 %v1074
        %v1121 = vunpack.c.l.b16 %v1075
        %v1122 = vunpack.c.l.b16 %v1076
        %v1123 = vunpack.c.l.b16 %v1077
        %v1124 = vunpack.c.l.b16 %v1078
        %v1125 = vunpack.c.l.b16 %v1079
        %v1126 = vunpack.c.l.b16 %v1080
        %v1127 = vpack.c.b16 %v1112, %v1111
        %v1128 = vpack.c.b16 %v1114, %v1113
        %v1129 = vpack.c.b16 %v1116, %v1115
        %v1130 = vpack.c.b16 %v1118, %v1117
        %v1131 = vpack.c.b16 %v1120, %v1119
        %v1132 = vpack.c.b16 %v1122, %v1121
        %v1133 = vpack.c.b16 %v1124, %v1123
        %v1134 = vpack.c.b16 %v1126, %v1125
        %1143 = vmatpush.bf16.msra.mxu0 %v1134
        %1144 = vmatpush.bf16.msra.mxu0 %v1133
        %1145 = vmatpush.bf16.msra.mxu0 %v1132
        %1146 = vmatpush.bf16.msra.mxu0 %v1131
        %1147 = vmatpush.bf16.msra.mxu0 %v1130
        %1148 = vmatpush.bf16.msra.mxu0 %v1129
        %1149 = vmatpush.bf16.msra.mxu0 %v1128
        %1150 = vmatpush.bf16.msra.mxu0 %v1127
        %1151 = vmatmul.bf16.gmra.mxu0 %v1093
        %v1152 = vpop.f32.mrf.mxu0
        %v1153 = vadd.f32 %v1082, %v1152
        %v1154 = vpop.f32.mrf.mxu0
        %1155 = vdwg.mxu0
        %v1156 = vadd.f32 %v1153, 0.0
        %v1157 = vld [vmem:[#allocation10] sm:$0xf]
        %v1158 = vld [vmem:[#allocation10 + $0x4] sm:$0xf]
        %v1159 = vld [vmem:[#allocation10 + $0x8] sm:$0xf]
        %v1160 = vld [vmem:[#allocation10 + $0xc] sm:$0xf]
        %v1161 = vld [vmem:[#allocation10 + $0x10] sm:$0xf]
        %v1162 = vld [vmem:[#allocation10 + $0x14] sm:$0xf]
        %v1163 = vld [vmem:[#allocation10 + $0x18] sm:$0xf]
        %v1164 = vld [vmem:[#allocation10 + $0x1c] sm:$0xf]
        %v1165 = vld [vmem:[#allocation10 + $0x20] sm:$0xf]
        %v1166 = vld [vmem:[#allocation10 + $0x24] sm:$0xf]
        %v1167 = vld [vmem:[#allocation10 + $0x28] sm:$0xf]
        %v1168 = vld [vmem:[#allocation10 + $0x2c] sm:$0xf]
        %v1169 = vld [vmem:[#allocation10 + $0x30] sm:$0xf]
        %v1170 = vld [vmem:[#allocation10 + $0x34] sm:$0xf]
        %v1171 = vld [vmem:[#allocation10 + $0x38] sm:$0xf]
        %v1172 = vld [vmem:[#allocation10 + $0x3c] sm:$0xf]
        %v1173 = vld [vmem:[%s5] sm:$0x1]
        %v1174 = vperm.slane %v1173, 0
        %v1176 = vunpack.c.l.b16 %v1063
        %v1177 = vpack.c.b16 %v1084, %v1176
        %v1195 = vunpack.c.l.b16 %v1157
        %v1196 = vunpack.c.l.b16 %v1158
        %v1197 = vunpack.c.l.b16 %v1159
        %v1198 = vunpack.c.l.b16 %v1160
        %v1199 = vunpack.c.l.b16 %v1161
        %v1200 = vunpack.c.l.b16 %v1162
        %v1201 = vunpack.c.l.b16 %v1163
        %v1202 = vunpack.c.l.b16 %v1164
        %v1203 = vunpack.c.l.b16 %v1165
        %v1204 = vunpack.c.l.b16 %v1166
        %v1205 = vunpack.c.l.b16 %v1167
        %v1206 = vunpack.c.l.b16 %v1168
        %v1207 = vunpack.c.l.b16 %v1169
        %v1208 = vunpack.c.l.b16 %v1170
        %v1209 = vunpack.c.l.b16 %v1171
        %v1210 = vunpack.c.l.b16 %v1172
        %v1211 = vpack.c.b16 %v1196, %v1195
        %v1212 = vpack.c.b16 %v1198, %v1197
        %v1213 = vpack.c.b16 %v1200, %v1199
        %v1214 = vpack.c.b16 %v1202, %v1201
        %v1215 = vpack.c.b16 %v1204, %v1203
        %v1216 = vpack.c.b16 %v1206, %v1205
        %v1217 = vpack.c.b16 %v1208, %v1207
        %v1218 = vpack.c.b16 %v1210, %v1209
        %1227 = vmatpush.bf16.msra.mxu0 %v1218
        %1228 = vmatpush.bf16.msra.mxu0 %v1217
        %1229 = vmatpush.bf16.msra.mxu0 %v1216
        %1230 = vmatpush.bf16.msra.mxu0 %v1215
        %1231 = vmatpush.bf16.msra.mxu0 %v1214
        %1232 = vmatpush.bf16.msra.mxu0 %v1213
        %1233 = vmatpush.bf16.msra.mxu0 %v1212
        %1234 = vmatpush.bf16.msra.mxu0 %v1211
        %1235 = vmatmul.bf16.gmra.mxu0 %v1177
        %v1236 = vpop.f32.mrf.mxu0
        %v1237 = vadd.f32 %v1174, %v1236
        %v1238 = vpop.f32.mrf.mxu0
        %v1239 = vadd.f32 %v1174, %v1238
        %1240 = vdwg.mxu0
        %v1241 = vadd.f32 %v735, %v1237
        %v1242 = vadd.f32 %v736, %v1239
        %v1243 = vpack.c.bf16 %v1241, %v1241
        %v1244 = vpack.c.bf16 %v1242, %v1242
        %s1245 = scalar_lea.vmem [#allocation7], 384
        %v1246 = vld [vmem:[%s1245] sm:$0xff]
        %v1247 = vld [vmem:[%s1245 + $0x8] sm:$0xff]
        %v1248 = vld [vmem:[%s1245 + $0x10] sm:$0xff]
        %v1249 = vld [vmem:[%s1245 + $0x18] sm:$0xff]
        %v1250 = vld [vmem:[%s1245 + $0x20] sm:$0xff]
        %v1251 = vld [vmem:[%s1245 + $0x28] sm:$0xff]
        %v1252 = vld [vmem:[%s1245 + $0x30] sm:$0xff]
        %v1253 = vld [vmem:[%s1245 + $0x38] sm:$0xff]
        %v1254 = vld [vmem:[%s1245 + $0x40] sm:$0xff]
        %v1255 = vld [vmem:[%s1245 + $0x48] sm:$0xff]
        %v1256 = vld [vmem:[%s1245 + $0x50] sm:$0xff]
        %v1257 = vld [vmem:[%s1245 + $0x58] sm:$0xff]
        %v1258 = vld [vmem:[%s1245 + $0x60] sm:$0xff]
        %v1259 = vld [vmem:[%s1245 + $0x68] sm:$0xff]
        %v1260 = vld [vmem:[%s1245 + $0x70] sm:$0xff]
        %v1261 = vld [vmem:[%s1245 + $0x78] sm:$0xff]
        %s1262 = scalar_lea.vmem [#allocation8], 1
        %v1263 = vld [vmem:[%s1262] ss:$4 sm:$0x3]
        %v1265 = vperm.slane %v1263, 0
        %v1266 = vperm.slane %v1263, 1
        %v1271 = vunpack.c.l.b16 %v1243
        %v1272 = vunpack.c.l.b16 %v1244
        %v1273 = vpack.c.b16 %v1272, %v1271
        %v1291 = vunpack.c.l.b16 %v1246
        %v1292 = vunpack.c.h.b16 %v1246
        %v1293 = vunpack.c.l.b16 %v1247
        %v1294 = vunpack.c.h.b16 %v1247
        %v1295 = vunpack.c.l.b16 %v1248
        %v1296 = vunpack.c.h.b16 %v1248
        %v1297 = vunpack.c.l.b16 %v1249
        %v1298 = vunpack.c.h.b16 %v1249
        %v1299 = vunpack.c.l.b16 %v1250
        %v1300 = vunpack.c.h.b16 %v1250
        %v1301 = vunpack.c.l.b16 %v1251
        %v1302 = vunpack.c.h.b16 %v1251
        %v1303 = vunpack.c.l.b16 %v1252
        %v1304 = vunpack.c.h.b16 %v1252
        %v1305 = vunpack.c.l.b16 %v1253
        %v1306 = vunpack.c.h.b16 %v1253
        %v1307 = vunpack.c.l.b16 %v1254
        %v1308 = vunpack.c.h.b16 %v1254
        %v1309 = vunpack.c.l.b16 %v1255
        %v1310 = vunpack.c.h.b16 %v1255
        %v1311 = vunpack.c.l.b16 %v1256
        %v1312 = vunpack.c.h.b16 %v1256
        %v1313 = vunpack.c.l.b16 %v1257
        %v1314 = vunpack.c.h.b16 %v1257
        %v1315 = vunpack.c.l.b16 %v1258
        %v1316 = vunpack.c.h.b16 %v1258
        %v1317 = vunpack.c.l.b16 %v1259
        %v1318 = vunpack.c.h.b16 %v1259
        %v1319 = vunpack.c.l.b16 %v1260
        %v1320 = vunpack.c.h.b16 %v1260
        %v1321 = vunpack.c.l.b16 %v1261
        %v1322 = vunpack.c.h.b16 %v1261
        %v1323 = vpack.c.b16 %v1293, %v1291
        %v1324 = vpack.c.b16 %v1294, %v1292
        %v1325 = vpack.c.b16 %v1297, %v1295
        %v1326 = vpack.c.b16 %v1298, %v1296
        %v1327 = vpack.c.b16 %v1301, %v1299
        %v1328 = vpack.c.b16 %v1302, %v1300
        %v1329 = vpack.c.b16 %v1305, %v1303
        %v1330 = vpack.c.b16 %v1306, %v1304
        %v1331 = vpack.c.b16 %v1309, %v1307
        %v1332 = vpack.c.b16 %v1310, %v1308
        %v1333 = vpack.c.b16 %v1313, %v1311
        %v1334 = vpack.c.b16 %v1314, %v1312
        %v1335 = vpack.c.b16 %v1317, %v1315
        %v1336 = vpack.c.b16 %v1318, %v1316
        %v1337 = vpack.c.b16 %v1321, %v1319
        %v1338 = vpack.c.b16 %v1322, %v1320
        %1355 = vmatpush.bf16.msra.mxu0 %v1337
        %1356 = vmatpush.bf16.msra.mxu0 %v1335
        %1357 = vmatpush.bf16.msra.mxu0 %v1333
        %1358 = vmatpush.bf16.msra.mxu0 %v1331
        %1359 = vmatpush.bf16.msra.mxu0 %v1329
        %1360 = vmatpush.bf16.msra.mxu0 %v1327
        %1361 = vmatpush.bf16.msra.mxu0 %v1325
        %1362 = vmatpush.bf16.msra.mxu0 %v1323
        %1363 = vmatmul.bf16.gmra.mxu0 %v1273
        %v1364 = vpop.f32.mrf.mxu0
        %v1365 = vadd.f32 %v1265, %v1364
        %v1366 = vpop.f32.mrf.mxu0
        %v1367 = vadd.f32 %v1265, %v1366
        %1368 = vdwg.mxu0
        %1369 = vmatpush.bf16.msra.mxu0 %v1338
        %1370 = vmatpush.bf16.msra.mxu0 %v1336
        %1371 = vmatpush.bf16.msra.mxu0 %v1334
        %1372 = vmatpush.bf16.msra.mxu0 %v1332
        %1373 = vmatpush.bf16.msra.mxu0 %v1330
        %1374 = vmatpush.bf16.msra.mxu0 %v1328
        %1375 = vmatpush.bf16.msra.mxu0 %v1326
        %1376 = vmatpush.bf16.msra.mxu0 %v1324
        %1377 = vmatmul.bf16.gmra.mxu0 %v1273
        %v1378 = vpop.f32.mrf.mxu0
        %v1379 = vadd.f32 %v1266, %v1378
        %v1380 = vpop.f32.mrf.mxu0
        %v1381 = vadd.f32 %v1266, %v1380
        %1382 = vdwg.mxu0
        %s1383 = scalar_lea.vmem [#allocation7], 256
        %v1384 = vld [vmem:[%s1383] sm:$0xff]
        %v1385 = vld [vmem:[%s1383 + $0x8] sm:$0xff]
        %v1386 = vld [vmem:[%s1383 + $0x10] sm:$0xff]
        %v1387 = vld [vmem:[%s1383 + $0x18] sm:$0xff]
        %v1388 = vld [vmem:[%s1383 + $0x20] sm:$0xff]
        %v1389 = vld [vmem:[%s1383 + $0x28] sm:$0xff]
        %v1390 = vld [vmem:[%s1383 + $0x30] sm:$0xff]
        %v1391 = vld [vmem:[%s1383 + $0x38] sm:$0xff]
        %v1392 = vld [vmem:[%s1383 + $0x40] sm:$0xff]
        %v1393 = vld [vmem:[%s1383 + $0x48] sm:$0xff]
        %v1394 = vld [vmem:[%s1383 + $0x50] sm:$0xff]
        %v1395 = vld [vmem:[%s1383 + $0x58] sm:$0xff]
        %v1396 = vld [vmem:[%s1383 + $0x60] sm:$0xff]
        %v1397 = vld [vmem:[%s1383 + $0x68] sm:$0xff]
        %v1398 = vld [vmem:[%s1383 + $0x70] sm:$0xff]
        %v1399 = vld [vmem:[%s1383 + $0x78] sm:$0xff]
        %v1416 = vunpack.c.l.b16 %v1384
        %v1417 = vunpack.c.h.b16 %v1384
        %v1418 = vunpack.c.l.b16 %v1385
        %v1419 = vunpack.c.h.b16 %v1385
        %v1420 = vunpack.c.l.b16 %v1386
        %v1421 = vunpack.c.h.b16 %v1386
        %v1422 = vunpack.c.l.b16 %v1387
        %v1423 = vunpack.c.h.b16 %v1387
        %v1424 = vunpack.c.l.b16 %v1388
        %v1425 = vunpack.c.h.b16 %v1388
        %v1426 = vunpack.c.l.b16 %v1389
        %v1427 = vunpack.c.h.b16 %v1389
        %v1428 = vunpack.c.l.b16 %v1390
        %v1429 = vunpack.c.h.b16 %v1390
        %v1430 = vunpack.c.l.b16 %v1391
        %v1431 = vunpack.c.h.b16 %v1391
        %v1432 = vunpack.c.l.b16 %v1392
        %v1433 = vunpack.c.h.b16 %v1392
        %v1434 = vunpack.c.l.b16 %v1393
        %v1435 = vunpack.c.h.b16 %v1393
        %v1436 = vunpack.c.l.b16 %v1394
        %v1437 = vunpack.c.h.b16 %v1394
        %v1438 = vunpack.c.l.b16 %v1395
        %v1439 = vunpack.c.h.b16 %v1395
        %v1440 = vunpack.c.l.b16 %v1396
        %v1441 = vunpack.c.h.b16 %v1396
        %v1442 = vunpack.c.l.b16 %v1397
        %v1443 = vunpack.c.h.b16 %v1397
        %v1444 = vunpack.c.l.b16 %v1398
        %v1445 = vunpack.c.h.b16 %v1398
        %v1446 = vunpack.c.l.b16 %v1399
        %v1447 = vunpack.c.h.b16 %v1399
        %v1448 = vpack.c.b16 %v1418, %v1416
        %v1449 = vpack.c.b16 %v1419, %v1417
        %v1450 = vpack.c.b16 %v1422, %v1420
        %v1451 = vpack.c.b16 %v1423, %v1421
        %v1452 = vpack.c.b16 %v1426, %v1424
        %v1453 = vpack.c.b16 %v1427, %v1425
        %v1454 = vpack.c.b16 %v1430, %v1428
        %v1455 = vpack.c.b16 %v1431, %v1429
        %v1456 = vpack.c.b16 %v1434, %v1432
        %v1457 = vpack.c.b16 %v1435, %v1433
        %v1458 = vpack.c.b16 %v1438, %v1436
        %v1459 = vpack.c.b16 %v1439, %v1437
        %v1460 = vpack.c.b16 %v1442, %v1440
        %v1461 = vpack.c.b16 %v1443, %v1441
        %v1462 = vpack.c.b16 %v1446, %v1444
        %v1463 = vpack.c.b16 %v1447, %v1445
        %1480 = vmatpush.bf16.msra.mxu0 %v1462
        %1481 = vmatpush.bf16.msra.mxu0 %v1460
        %1482 = vmatpush.bf16.msra.mxu0 %v1458
        %1483 = vmatpush.bf16.msra.mxu0 %v1456
        %1484 = vmatpush.bf16.msra.mxu0 %v1454
        %1485 = vmatpush.bf16.msra.mxu0 %v1452
        %1486 = vmatpush.bf16.msra.mxu0 %v1450
        %1487 = vmatpush.bf16.msra.mxu0 %v1448
        %1488 = vmatmul.bf16.gmra.mxu0 %v1273
        %v1489 = vpop.f32.mrf.mxu0
        %v1490 = vadd.f32 0.0, %v1489
        %v1491 = vpop.f32.mrf.mxu0
        %v1492 = vadd.f32 0.0, %v1491
        %1493 = vdwg.mxu0
        %1494 = vmatpush.bf16.msra.mxu0 %v1463
        %1495 = vmatpush.bf16.msra.mxu0 %v1461
        %1496 = vmatpush.bf16.msra.mxu0 %v1459
        %1497 = vmatpush.bf16.msra.mxu0 %v1457
        %1498 = vmatpush.bf16.msra.mxu0 %v1455
        %1499 = vmatpush.bf16.msra.mxu0 %v1453
        %1500 = vmatpush.bf16.msra.mxu0 %v1451
        %1501 = vmatpush.bf16.msra.mxu0 %v1449
        %1502 = vmatmul.bf16.gmra.mxu0 %v1273
        %v1503 = vpop.f32.mrf.mxu0
        %v1504 = vadd.f32 0.0, %v1503
        %v1505 = vpop.f32.mrf.mxu0
        %v1506 = vadd.f32 0.0, %v1505
        %1507 = vdwg.mxu0
        %vm1512 = vcmask 1041408
        %v1513 = vrot.slane %v1490, 6
        %v1514 = vrot.slane %v1504, 6
        %v1515 = vrot.slane %v1492, 6
        %v1516 = vsel %vm1512, %v1513, %v1515
        %v1517 = vrot.slane %v1506, 6
        %v1518 = vsel %vm1512, %v1514, %v1517
        %v1523 = vadd.f32 %v1365, %v1513
        %v1524 = vadd.f32 %v1379, %v1514
        %v1525 = vadd.f32 %v1367, %v1516
        %v1526 = vadd.f32 %v1381, %v1518
        %v1527 = vsel %vm1512, %v1365, %v1523
        %v1528 = vsel %vm1512, %v1379, %v1524
        %v1529 = vtanh.pop %v1527
        %v1530 = vtanh.pop %v1525
        %v1531 = vxor.u32 %v1528, 2147483648
        %v1532 = vxor.u32 %v1526, 2147483648
        %v1533 = vmul.f32 %v1531, 1.442695
        %v1534 = vpow.pop %v1533
        %v1535 = vmul.f32 %v1532, 1.442695
        %v1536 = vpow.pop %v1535
        %v1537 = vadd.f32 %v1534, 1.0
        %v1538 = vadd.f32 %v1536, 1.0
        %v1539 = vrcp.pop %v1537
        %v1540 = vmul.f32 %v1537, %v1539
        %v1541 = vsub.f32 1.0, %v1540
        %v1542 = vmul.f32 %v1539, %v1541
        %v1543 = vadd.f32 %v1539, %v1542
        %vm1544 = vweird.f32 %v1537
        %vm1545 = vweird.f32 %v1539
        %vm1546 = vmor %vm1544, %vm1545
        %v1547 = vsel %vm1546, %v1539, %v1543
        %v1548 = vand.u32 2147483647, %v1537
        %vm1549 = vcmp.eq.f32.partialorder %v1548, 8.507059e+37
        %v1550 = vand.u32 %v1537, 2147483648
        %v1551 = vor.u32 1.1754944e-38, %v1550
        %v1552 = vsel %vm1549, %v1551, %v1547
        %v1553 = vmul.f32 1.0, %v1552
        %v1554 = vrcp.pop %v1538
        %v1555 = vmul.f32 %v1538, %v1554
        %v1556 = vsub.f32 1.0, %v1555
        %v1557 = vmul.f32 %v1554, %v1556
        %v1558 = vadd.f32 %v1554, %v1557
        %vm1559 = vweird.f32 %v1538
        %vm1560 = vweird.f32 %v1554
        %vm1561 = vmor %vm1559, %vm1560
        %v1562 = vsel %vm1561, %v1554, %v1558
        %v1563 = vand.u32 2147483647, %v1538
        %vm1564 = vcmp.eq.f32.partialorder %v1563, 8.507059e+37
        %v1565 = vand.u32 %v1538, 2147483648
        %v1566 = vor.u32 1.1754944e-38, %v1565
        %v1567 = vsel %vm1564, %v1566, %v1562
        %v1568 = vmul.f32 1.0, %v1567
        %v1569 = vmul.f32 %v1529, %v1553
        %v1570 = vmul.f32 %v1530, %v1568
        %v1571 = vpack.c.bf16 %v1569, %v1569
        %v1572 = vpack.c.bf16 %v1570, %v1570
        %s1573 = scalar_lea.vmem [#allocation11], 64
        %v1574 = vld [vmem:[%s1573] sm:$0xf]
        %v1575 = vld [vmem:[%s1573 + $0x4] sm:$0xf]
        %v1576 = vld [vmem:[%s1573 + $0x8] sm:$0xf]
        %v1577 = vld [vmem:[%s1573 + $0xc] sm:$0xf]
        %v1578 = vld [vmem:[%s1573 + $0x10] sm:$0xf]
        %v1579 = vld [vmem:[%s1573 + $0x14] sm:$0xf]
        %v1580 = vld [vmem:[%s1573 + $0x18] sm:$0xf]
        %v1581 = vld [vmem:[%s1573 + $0x1c] sm:$0xf]
        %v1582 = vld [vmem:[%s1573 + $0x20] sm:$0xf]
        %v1583 = vld [vmem:[%s1573 + $0x24] sm:$0xf]
        %v1584 = vld [vmem:[%s1573 + $0x28] sm:$0xf]
        %v1585 = vld [vmem:[%s1573 + $0x2c] sm:$0xf]
        %v1586 = vld [vmem:[%s1573 + $0x30] sm:$0xf]
        %v1587 = vld [vmem:[%s1573 + $0x34] sm:$0xf]
        %v1588 = vld [vmem:[%s1573 + $0x38] sm:$0xf]
        %v1589 = vld [vmem:[%s1573 + $0x3c] sm:$0xf]
        %v1590 = vld [vmem:[#allocation13 + $0x1] sm:$0x1]
        %v1591 = vperm.slane %v1590, 0
        %v1593 = vunpack.c.l.b16 %v1572
        %v1594 = vpack.c.b16 %v1593, %v1593
        %v1596 = vshrl.u32 %v1594, 16
        %v1598 = vrot.slane %v1596, 1
        %v1599 = vshll.u32 %v1594, 16
        %v1601 = vrot.slane %v1599, 2
        %v1602 = vor.u32 %v1598, %v1601
        %v1620 = vunpack.c.l.b16 %v1574
        %v1621 = vunpack.c.l.b16 %v1575
        %v1622 = vunpack.c.l.b16 %v1576
        %v1623 = vunpack.c.l.b16 %v1577
        %v1624 = vunpack.c.l.b16 %v1578
        %v1625 = vunpack.c.l.b16 %v1579
        %v1626 = vunpack.c.l.b16 %v1580
        %v1627 = vunpack.c.l.b16 %v1581
        %v1628 = vunpack.c.l.b16 %v1582
        %v1629 = vunpack.c.l.b16 %v1583
        %v1630 = vunpack.c.l.b16 %v1584
        %v1631 = vunpack.c.l.b16 %v1585
        %v1632 = vunpack.c.l.b16 %v1586
        %v1633 = vunpack.c.l.b16 %v1587
        %v1634 = vunpack.c.l.b16 %v1588
        %v1635 = vunpack.c.l.b16 %v1589
        %v1636 = vpack.c.b16 %v1621, %v1620
        %v1637 = vpack.c.b16 %v1623, %v1622
        %v1638 = vpack.c.b16 %v1625, %v1624
        %v1639 = vpack.c.b16 %v1627, %v1626
        %v1640 = vpack.c.b16 %v1629, %v1628
        %v1641 = vpack.c.b16 %v1631, %v1630
        %v1642 = vpack.c.b16 %v1633, %v1632
        %v1643 = vpack.c.b16 %v1635, %v1634
        %1652 = vmatpush.bf16.msra.mxu0 %v1643
        %1653 = vmatpush.bf16.msra.mxu0 %v1642
        %1654 = vmatpush.bf16.msra.mxu0 %v1641
        %1655 = vmatpush.bf16.msra.mxu0 %v1640
        %1656 = vmatpush.bf16.msra.mxu0 %v1639
        %1657 = vmatpush.bf16.msra.mxu0 %v1638
        %1658 = vmatpush.bf16.msra.mxu0 %v1637
        %1659 = vmatpush.bf16.msra.mxu0 %v1636
        %1660 = vmatmul.bf16.gmra.mxu0 %v1602
        %v1661 = vpop.f32.mrf.mxu0
        %v1662 = vadd.f32 %v1591, %v1661
        %v1663 = vpop.f32.mrf.mxu0
        %1664 = vdwg.mxu0
        %v1665 = vadd.f32 %v1156, %v1662
        %s1666 = scalar_lea.vmem [#allocation10], 64
        %v1667 = vld [vmem:[%s1666] sm:$0xf]
        %v1668 = vld [vmem:[%s1666 + $0x4] sm:$0xf]
        %v1669 = vld [vmem:[%s1666 + $0x8] sm:$0xf]
        %v1670 = vld [vmem:[%s1666 + $0xc] sm:$0xf]
        %v1671 = vld [vmem:[%s1666 + $0x10] sm:$0xf]
        %v1672 = vld [vmem:[%s1666 + $0x14] sm:$0xf]
        %v1673 = vld [vmem:[%s1666 + $0x18] sm:$0xf]
        %v1674 = vld [vmem:[%s1666 + $0x1c] sm:$0xf]
        %v1675 = vld [vmem:[%s1666 + $0x20] sm:$0xf]
        %v1676 = vld [vmem:[%s1666 + $0x24] sm:$0xf]
        %v1677 = vld [vmem:[%s1666 + $0x28] sm:$0xf]
        %v1678 = vld [vmem:[%s1666 + $0x2c] sm:$0xf]
        %v1679 = vld [vmem:[%s1666 + $0x30] sm:$0xf]
        %v1680 = vld [vmem:[%s1666 + $0x34] sm:$0xf]
        %v1681 = vld [vmem:[%s1666 + $0x38] sm:$0xf]
        %v1682 = vld [vmem:[%s1666 + $0x3c] sm:$0xf]
        %v1683 = vld [vmem:[%s5 + $0x1] sm:$0x1]
        %v1684 = vperm.slane %v1683, 0
        %v1686 = vunpack.c.l.b16 %v1571
        %v1687 = vpack.c.b16 %v1593, %v1686
        %v1705 = vunpack.c.l.b16 %v1667
        %v1706 = vunpack.c.l.b16 %v1668
        %v1707 = vunpack.c.l.b16 %v1669
        %v1708 = vunpack.c.l.b16 %v1670
        %v1709 = vunpack.c.l.b16 %v1671
        %v1710 = vunpack.c.l.b16 %v1672
        %v1711 = vunpack.c.l.b16 %v1673
        %v1712 = vunpack.c.l.b16 %v1674
        %v1713 = vunpack.c.l.b16 %v1675
        %v1714 = vunpack.c.l.b16 %v1676
        %v1715 = vunpack.c.l.b16 %v1677
        %v1716 = vunpack.c.l.b16 %v1678
        %v1717 = vunpack.c.l.b16 %v1679
        %v1718 = vunpack.c.l.b16 %v1680
        %v1719 = vunpack.c.l.b16 %v1681
        %v1720 = vunpack.c.l.b16 %v1682
        %v1721 = vpack.c.b16 %v1706, %v1705
        %v1722 = vpack.c.b16 %v1708, %v1707
        %v1723 = vpack.c.b16 %v1710, %v1709
        %v1724 = vpack.c.b16 %v1712, %v1711
        %v1725 = vpack.c.b16 %v1714, %v1713
        %v1726 = vpack.c.b16 %v1716, %v1715
        %v1727 = vpack.c.b16 %v1718, %v1717
        %v1728 = vpack.c.b16 %v1720, %v1719
        %1737 = vmatpush.bf16.msra.mxu0 %v1728
        %1738 = vmatpush.bf16.msra.mxu0 %v1727
        %1739 = vmatpush.bf16.msra.mxu0 %v1726
        %1740 = vmatpush.bf16.msra.mxu0 %v1725
        %1741 = vmatpush.bf16.msra.mxu0 %v1724
        %1742 = vmatpush.bf16.msra.mxu0 %v1723
        %1743 = vmatpush.bf16.msra.mxu0 %v1722
        %1744 = vmatpush.bf16.msra.mxu0 %v1721
        %1745 = vmatmul.bf16.gmra.mxu0 %v1687
        %v1746 = vpop.f32.mrf.mxu0
        %v1747 = vadd.f32 %v1684, %v1746
        %v1748 = vpop.f32.mrf.mxu0
        %v1749 = vadd.f32 %v1684, %v1748
        %1750 = vdwg.mxu0
        %v1751 = vadd.f32 %v1241, %v1747
        %v1752 = vadd.f32 %v1242, %v1749
        %v1753 = vpack.c.bf16 %v1751, %v1751
        %v1754 = vpack.c.bf16 %v1752, %v1752
        %s1755 = scalar_lea.vmem [#allocation7], 640
        %v1756 = vld [vmem:[%s1755] sm:$0xff]
        %v1757 = vld [vmem:[%s1755 + $0x8] sm:$0xff]
        %v1758 = vld [vmem:[%s1755 + $0x10] sm:$0xff]
        %v1759 = vld [vmem:[%s1755 + $0x18] sm:$0xff]
        %v1760 = vld [vmem:[%s1755 + $0x20] sm:$0xff]
        %v1761 = vld [vmem:[%s1755 + $0x28] sm:$0xff]
        %v1762 = vld [vmem:[%s1755 + $0x30] sm:$0xff]
        %v1763 = vld [vmem:[%s1755 + $0x38] sm:$0xff]
        %v1764 = vld [vmem:[%s1755 + $0x40] sm:$0xff]
        %v1765 = vld [vmem:[%s1755 + $0x48] sm:$0xff]
        %v1766 = vld [vmem:[%s1755 + $0x50] sm:$0xff]
        %v1767 = vld [vmem:[%s1755 + $0x58] sm:$0xff]
        %v1768 = vld [vmem:[%s1755 + $0x60] sm:$0xff]
        %v1769 = vld [vmem:[%s1755 + $0x68] sm:$0xff]
        %v1770 = vld [vmem:[%s1755 + $0x70] sm:$0xff]
        %v1771 = vld [vmem:[%s1755 + $0x78] sm:$0xff]
        %s1772 = scalar_lea.vmem [#allocation8], 2
        %v1773 = vld [vmem:[%s1772] ss:$4 sm:$0x3]
        %v1775 = vperm.slane %v1773, 0
        %v1776 = vperm.slane %v1773, 1
        %v1781 = vunpack.c.l.b16 %v1753
        %v1782 = vunpack.c.l.b16 %v1754
        %v1783 = vpack.c.b16 %v1782, %v1781
        %v1801 = vunpack.c.l.b16 %v1756
        %v1802 = vunpack.c.h.b16 %v1756
        %v1803 = vunpack.c.l.b16 %v1757
        %v1804 = vunpack.c.h.b16 %v1757
        %v1805 = vunpack.c.l.b16 %v1758
        %v1806 = vunpack.c.h.b16 %v1758
        %v1807 = vunpack.c.l.b16 %v1759
        %v1808 = vunpack.c.h.b16 %v1759
        %v1809 = vunpack.c.l.b16 %v1760
        %v1810 = vunpack.c.h.b16 %v1760
        %v1811 = vunpack.c.l.b16 %v1761
        %v1812 = vunpack.c.h.b16 %v1761
        %v1813 = vunpack.c.l.b16 %v1762
        %v1814 = vunpack.c.h.b16 %v1762
        %v1815 = vunpack.c.l.b16 %v1763
        %v1816 = vunpack.c.h.b16 %v1763
        %v1817 = vunpack.c.l.b16 %v1764
        %v1818 = vunpack.c.h.b16 %v1764
        %v1819 = vunpack.c.l.b16 %v1765
        %v1820 = vunpack.c.h.b16 %v1765
        %v1821 = vunpack.c.l.b16 %v1766
        %v1822 = vunpack.c.h.b16 %v1766
        %v1823 = vunpack.c.l.b16 %v1767
        %v1824 = vunpack.c.h.b16 %v1767
        %v1825 = vunpack.c.l.b16 %v1768
        %v1826 = vunpack.c.h.b16 %v1768
        %v1827 = vunpack.c.l.b16 %v1769
        %v1828 = vunpack.c.h.b16 %v1769
        %v1829 = vunpack.c.l.b16 %v1770
        %v1830 = vunpack.c.h.b16 %v1770
        %v1831 = vunpack.c.l.b16 %v1771
        %v1832 = vunpack.c.h.b16 %v1771
        %v1833 = vpack.c.b16 %v1803, %v1801
        %v1834 = vpack.c.b16 %v1804, %v1802
        %v1835 = vpack.c.b16 %v1807, %v1805
        %v1836 = vpack.c.b16 %v1808, %v1806
        %v1837 = vpack.c.b16 %v1811, %v1809
        %v1838 = vpack.c.b16 %v1812, %v1810
        %v1839 = vpack.c.b16 %v1815, %v1813
        %v1840 = vpack.c.b16 %v1816, %v1814
        %v1841 = vpack.c.b16 %v1819, %v1817
        %v1842 = vpack.c.b16 %v1820, %v1818
        %v1843 = vpack.c.b16 %v1823, %v1821
        %v1844 = vpack.c.b16 %v1824, %v1822
        %v1845 = vpack.c.b16 %v1827, %v1825
        %v1846 = vpack.c.b16 %v1828, %v1826
        %v1847 = vpack.c.b16 %v1831, %v1829
        %v1848 = vpack.c.b16 %v1832, %v1830
        %1865 = vmatpush.bf16.msra.mxu0 %v1847
        %1866 = vmatpush.bf16.msra.mxu0 %v1845
        %1867 = vmatpush.bf16.msra.mxu0 %v1843
        %1868 = vmatpush.bf16.msra.mxu0 %v1841
        %1869 = vmatpush.bf16.msra.mxu0 %v1839
        %1870 = vmatpush.bf16.msra.mxu0 %v1837
        %1871 = vmatpush.bf16.msra.mxu0 %v1835
        %1872 = vmatpush.bf16.msra.mxu0 %v1833
        %1873 = vmatmul.bf16.gmra.mxu0 %v1783
        %v1874 = vpop.f32.mrf.mxu0
        %v1875 = vadd.f32 %v1775, %v1874
        %v1876 = vpop.f32.mrf.mxu0
        %v1877 = vadd.f32 %v1775, %v1876
        %1878 = vdwg.mxu0
        %1879 = vmatpush.bf16.msra.mxu0 %v1848
        %1880 = vmatpush.bf16.msra.mxu0 %v1846
        %1881 = vmatpush.bf16.msra.mxu0 %v1844
        %1882 = vmatpush.bf16.msra.mxu0 %v1842
        %1883 = vmatpush.bf16.msra.mxu0 %v1840
        %1884 = vmatpush.bf16.msra.mxu0 %v1838
        %1885 = vmatpush.bf16.msra.mxu0 %v1836
        %1886 = vmatpush.bf16.msra.mxu0 %v1834
        %1887 = vmatmul.bf16.gmra.mxu0 %v1783
        %v1888 = vpop.f32.mrf.mxu0
        %v1889 = vadd.f32 %v1776, %v1888
        %v1890 = vpop.f32.mrf.mxu0
        %v1891 = vadd.f32 %v1776, %v1890
        %1892 = vdwg.mxu0
        %s1893 = scalar_lea.vmem [#allocation7], 512
        %v1894 = vld [vmem:[%s1893] sm:$0xff]
        %v1895 = vld [vmem:[%s1893 + $0x8] sm:$0xff]
        %v1896 = vld [vmem:[%s1893 + $0x10] sm:$0xff]
        %v1897 = vld [vmem:[%s1893 + $0x18] sm:$0xff]
        %v1898 = vld [vmem:[%s1893 + $0x20] sm:$0xff]
        %v1899 = vld [vmem:[%s1893 + $0x28] sm:$0xff]
        %v1900 = vld [vmem:[%s1893 + $0x30] sm:$0xff]
        %v1901 = vld [vmem:[%s1893 + $0x38] sm:$0xff]
        %v1902 = vld [vmem:[%s1893 + $0x40] sm:$0xff]
        %v1903 = vld [vmem:[%s1893 + $0x48] sm:$0xff]
        %v1904 = vld [vmem:[%s1893 + $0x50] sm:$0xff]
        %v1905 = vld [vmem:[%s1893 + $0x58] sm:$0xff]
        %v1906 = vld [vmem:[%s1893 + $0x60] sm:$0xff]
        %v1907 = vld [vmem:[%s1893 + $0x68] sm:$0xff]
        %v1908 = vld [vmem:[%s1893 + $0x70] sm:$0xff]
        %v1909 = vld [vmem:[%s1893 + $0x78] sm:$0xff]
        %v1926 = vunpack.c.l.b16 %v1894
        %v1927 = vunpack.c.h.b16 %v1894
        %v1928 = vunpack.c.l.b16 %v1895
        %v1929 = vunpack.c.h.b16 %v1895
        %v1930 = vunpack.c.l.b16 %v1896
        %v1931 = vunpack.c.h.b16 %v1896
        %v1932 = vunpack.c.l.b16 %v1897
        %v1933 = vunpack.c.h.b16 %v1897
        %v1934 = vunpack.c.l.b16 %v1898
        %v1935 = vunpack.c.h.b16 %v1898
        %v1936 = vunpack.c.l.b16 %v1899
        %v1937 = vunpack.c.h.b16 %v1899
        %v1938 = vunpack.c.l.b16 %v1900
        %v1939 = vunpack.c.h.b16 %v1900
        %v1940 = vunpack.c.l.b16 %v1901
        %v1941 = vunpack.c.h.b16 %v1901
        %v1942 = vunpack.c.l.b16 %v1902
        %v1943 = vunpack.c.h.b16 %v1902
        %v1944 = vunpack.c.l.b16 %v1903
        %v1945 = vunpack.c.h.b16 %v1903
        %v1946 = vunpack.c.l.b16 %v1904
        %v1947 = vunpack.c.h.b16 %v1904
        %v1948 = vunpack.c.l.b16 %v1905
        %v1949 = vunpack.c.h.b16 %v1905
        %v1950 = vunpack.c.l.b16 %v1906
        %v1951 = vunpack.c.h.b16 %v1906
        %v1952 = vunpack.c.l.b16 %v1907
        %v1953 = vunpack.c.h.b16 %v1907
        %v1954 = vunpack.c.l.b16 %v1908
        %v1955 = vunpack.c.h.b16 %v1908
        %v1956 = vunpack.c.l.b16 %v1909
        %v1957 = vunpack.c.h.b16 %v1909
        %v1958 = vpack.c.b16 %v1928, %v1926
        %v1959 = vpack.c.b16 %v1929, %v1927
        %v1960 = vpack.c.b16 %v1932, %v1930
        %v1961 = vpack.c.b16 %v1933, %v1931
        %v1962 = vpack.c.b16 %v1936, %v1934
        %v1963 = vpack.c.b16 %v1937, %v1935
        %v1964 = vpack.c.b16 %v1940, %v1938
        %v1965 = vpack.c.b16 %v1941, %v1939
        %v1966 = vpack.c.b16 %v1944, %v1942
        %v1967 = vpack.c.b16 %v1945, %v1943
        %v1968 = vpack.c.b16 %v1948, %v1946
        %v1969 = vpack.c.b16 %v1949, %v1947
        %v1970 = vpack.c.b16 %v1952, %v1950
        %v1971 = vpack.c.b16 %v1953, %v1951
        %v1972 = vpack.c.b16 %v1956, %v1954
        %v1973 = vpack.c.b16 %v1957, %v1955
        %1990 = vmatpush.bf16.msra.mxu0 %v1972
        %1991 = vmatpush.bf16.msra.mxu0 %v1970
        %1992 = vmatpush.bf16.msra.mxu0 %v1968
        %1993 = vmatpush.bf16.msra.mxu0 %v1966
        %1994 = vmatpush.bf16.msra.mxu0 %v1964
        %1995 = vmatpush.bf16.msra.mxu0 %v1962
        %1996 = vmatpush.bf16.msra.mxu0 %v1960
        %1997 = vmatpush.bf16.msra.mxu0 %v1958
        %1998 = vmatmul.bf16.gmra.mxu0 %v1783
        %v1999 = vpop.f32.mrf.mxu0
        %v2000 = vadd.f32 0.0, %v1999
        %v2001 = vpop.f32.mrf.mxu0
        %v2002 = vadd.f32 0.0, %v2001
        %2003 = vdwg.mxu0
        %2004 = vmatpush.bf16.msra.mxu0 %v1973
        %2005 = vmatpush.bf16.msra.mxu0 %v1971
        %2006 = vmatpush.bf16.msra.mxu0 %v1969
        %2007 = vmatpush.bf16.msra.mxu0 %v1967
        %2008 = vmatpush.bf16.msra.mxu0 %v1965
        %2009 = vmatpush.bf16.msra.mxu0 %v1963
        %2010 = vmatpush.bf16.msra.mxu0 %v1961
        %2011 = vmatpush.bf16.msra.mxu0 %v1959
        %2012 = vmatmul.bf16.gmra.mxu0 %v1783
        %v2013 = vpop.f32.mrf.mxu0
        %v2014 = vadd.f32 0.0, %v2013
        %v2015 = vpop.f32.mrf.mxu0
        %v2016 = vadd.f32 0.0, %v2015
        %2017 = vdwg.mxu0
        %v2022 = vrot.slane %v2000, 7
        %v2023 = vrot.slane %v2014, 7
        %v2024 = vrot.slane %v2002, 7
        %v2025 = vsel %vm1004, %v2022, %v2024
        %v2026 = vrot.slane %v2016, 7
        %v2027 = vsel %vm1004, %v2023, %v2026
        %v2032 = vadd.f32 %v1875, %v2022
        %v2033 = vadd.f32 %v1889, %v2023
        %v2034 = vadd.f32 %v1877, %v2025
        %v2035 = vadd.f32 %v1891, %v2027
        %v2036 = vsel %vm1004, %v1875, %v2032
        %v2037 = vsel %vm1004, %v1889, %v2033
        %v2038 = vtanh.pop %v2036
        %v2039 = vtanh.pop %v2034
        %v2040 = vxor.u32 %v2037, 2147483648
        %v2041 = vxor.u32 %v2035, 2147483648
        %v2042 = vmul.f32 %v2040, 1.442695
        %v2043 = vpow.pop %v2042
        %v2044 = vmul.f32 %v2041, 1.442695
        %v2045 = vpow.pop %v2044
        %v2046 = vadd.f32 %v2043, 1.0
        %v2047 = vadd.f32 %v2045, 1.0
        %v2048 = vrcp.pop %v2046
        %v2049 = vmul.f32 %v2046, %v2048
        %v2050 = vsub.f32 1.0, %v2049
        %v2051 = vmul.f32 %v2048, %v2050
        %v2052 = vadd.f32 %v2048, %v2051
        %vm2053 = vweird.f32 %v2046
        %vm2054 = vweird.f32 %v2048
        %vm2055 = vmor %vm2053, %vm2054
        %v2056 = vsel %vm2055, %v2048, %v2052
        %v2057 = vand.u32 2147483647, %v2046
        %vm2058 = vcmp.eq.f32.partialorder %v2057, 8.507059e+37
        %v2059 = vand.u32 %v2046, 2147483648
        %v2060 = vor.u32 1.1754944e-38, %v2059
        %v2061 = vsel %vm2058, %v2060, %v2056
        %v2062 = vmul.f32 1.0, %v2061
        %v2063 = vrcp.pop %v2047
        %v2064 = vmul.f32 %v2047, %v2063
        %v2065 = vsub.f32 1.0, %v2064
        %v2066 = vmul.f32 %v2063, %v2065
        %v2067 = vadd.f32 %v2063, %v2066
        %vm2068 = vweird.f32 %v2047
        %vm2069 = vweird.f32 %v2063
        %vm2070 = vmor %vm2068, %vm2069
        %v2071 = vsel %vm2070, %v2063, %v2067
        %v2072 = vand.u32 2147483647, %v2047
        %vm2073 = vcmp.eq.f32.partialorder %v2072, 8.507059e+37
        %v2074 = vand.u32 %v2047, 2147483648
        %v2075 = vor.u32 1.1754944e-38, %v2074
        %v2076 = vsel %vm2073, %v2075, %v2071
        %v2077 = vmul.f32 1.0, %v2076
        %v2078 = vmul.f32 %v2038, %v2062
        %v2079 = vmul.f32 %v2039, %v2077
        %v2080 = vpack.c.bf16 %v2078, %v2078
        %v2081 = vpack.c.bf16 %v2079, %v2079
        %s2082 = scalar_lea.vmem [#allocation11], 128
        %v2083 = vld [vmem:[%s2082] sm:$0xf]
        %v2084 = vld [vmem:[%s2082 + $0x4] sm:$0xf]
        %v2085 = vld [vmem:[%s2082 + $0x8] sm:$0xf]
        %v2086 = vld [vmem:[%s2082 + $0xc] sm:$0xf]
        %v2087 = vld [vmem:[%s2082 + $0x10] sm:$0xf]
        %v2088 = vld [vmem:[%s2082 + $0x14] sm:$0xf]
        %v2089 = vld [vmem:[%s2082 + $0x18] sm:$0xf]
        %v2090 = vld [vmem:[%s2082 + $0x1c] sm:$0xf]
        %v2091 = vld [vmem:[%s2082 + $0x20] sm:$0xf]
        %v2092 = vld [vmem:[%s2082 + $0x24] sm:$0xf]
        %v2093 = vld [vmem:[%s2082 + $0x28] sm:$0xf]
        %v2094 = vld [vmem:[%s2082 + $0x2c] sm:$0xf]
        %v2095 = vld [vmem:[%s2082 + $0x30] sm:$0xf]
        %v2096 = vld [vmem:[%s2082 + $0x34] sm:$0xf]
        %v2097 = vld [vmem:[%s2082 + $0x38] sm:$0xf]
        %v2098 = vld [vmem:[%s2082 + $0x3c] sm:$0xf]
        %v2099 = vld [vmem:[#allocation13 + $0x2] sm:$0x1]
        %v2100 = vperm.slane %v2099, 0
        %v2102 = vunpack.c.l.b16 %v2081
        %v2103 = vpack.c.b16 %v2102, %v2102
        %v2105 = vshrl.u32 %v2103, 16
        %v2107 = vrot.slane %v2105, 1
        %v2108 = vshll.u32 %v2103, 16
        %v2110 = vrot.slane %v2108, 2
        %v2111 = vor.u32 %v2107, %v2110
        %v2129 = vunpack.c.l.b16 %v2083
        %v2130 = vunpack.c.l.b16 %v2084
        %v2131 = vunpack.c.l.b16 %v2085
        %v2132 = vunpack.c.l.b16 %v2086
        %v2133 = vunpack.c.l.b16 %v2087
        %v2134 = vunpack.c.l.b16 %v2088
        %v2135 = vunpack.c.l.b16 %v2089
        %v2136 = vunpack.c.l.b16 %v2090
        %v2137 = vunpack.c.l.b16 %v2091
        %v2138 = vunpack.c.l.b16 %v2092
        %v2139 = vunpack.c.l.b16 %v2093
        %v2140 = vunpack.c.l.b16 %v2094
        %v2141 = vunpack.c.l.b16 %v2095
        %v2142 = vunpack.c.l.b16 %v2096
        %v2143 = vunpack.c.l.b16 %v2097
        %v2144 = vunpack.c.l.b16 %v2098
        %v2145 = vpack.c.b16 %v2130, %v2129
        %v2146 = vpack.c.b16 %v2132, %v2131
        %v2147 = vpack.c.b16 %v2134, %v2133
        %v2148 = vpack.c.b16 %v2136, %v2135
        %v2149 = vpack.c.b16 %v2138, %v2137
        %v2150 = vpack.c.b16 %v2140, %v2139
        %v2151 = vpack.c.b16 %v2142, %v2141
        %v2152 = vpack.c.b16 %v2144, %v2143
        %2161 = vmatpush.bf16.msra.mxu0 %v2152
        %2162 = vmatpush.bf16.msra.mxu0 %v2151
        %2163 = vmatpush.bf16.msra.mxu0 %v2150
        %2164 = vmatpush.bf16.msra.mxu0 %v2149
        %2165 = vmatpush.bf16.msra.mxu0 %v2148
        %2166 = vmatpush.bf16.msra.mxu0 %v2147
        %2167 = vmatpush.bf16.msra.mxu0 %v2146
        %2168 = vmatpush.bf16.msra.mxu0 %v2145
        %2169 = vmatmul.bf16.gmra.mxu0 %v2111
        %v2170 = vpop.f32.mrf.mxu0
        %v2171 = vadd.f32 %v2100, %v2170
        %v2172 = vpop.f32.mrf.mxu0
        %2173 = vdwg.mxu0
        %v2174 = vadd.f32 %v1665, %v2171
        %s2175 = scalar_lea.vmem [#allocation10], 128
        %v2176 = vld [vmem:[%s2175] sm:$0xf]
        %v2177 = vld [vmem:[%s2175 + $0x4] sm:$0xf]
        %v2178 = vld [vmem:[%s2175 + $0x8] sm:$0xf]
        %v2179 = vld [vmem:[%s2175 + $0xc] sm:$0xf]
        %v2180 = vld [vmem:[%s2175 + $0x10] sm:$0xf]
        %v2181 = vld [vmem:[%s2175 + $0x14] sm:$0xf]
        %v2182 = vld [vmem:[%s2175 + $0x18] sm:$0xf]
        %v2183 = vld [vmem:[%s2175 + $0x1c] sm:$0xf]
        %v2184 = vld [vmem:[%s2175 + $0x20] sm:$0xf]
        %v2185 = vld [vmem:[%s2175 + $0x24] sm:$0xf]
        %v2186 = vld [vmem:[%s2175 + $0x28] sm:$0xf]
        %v2187 = vld [vmem:[%s2175 + $0x2c] sm:$0xf]
        %v2188 = vld [vmem:[%s2175 + $0x30] sm:$0xf]
        %v2189 = vld [vmem:[%s2175 + $0x34] sm:$0xf]
        %v2190 = vld [vmem:[%s2175 + $0x38] sm:$0xf]
        %v2191 = vld [vmem:[%s2175 + $0x3c] sm:$0xf]
        %v2192 = vld [vmem:[%s5 + $0x2] sm:$0x1]
        %v2193 = vperm.slane %v2192, 0
        %v2195 = vunpack.c.l.b16 %v2080
        %v2196 = vpack.c.b16 %v2102, %v2195
        %v2214 = vunpack.c.l.b16 %v2176
        %v2215 = vunpack.c.l.b16 %v2177
        %v2216 = vunpack.c.l.b16 %v2178
        %v2217 = vunpack.c.l.b16 %v2179
        %v2218 = vunpack.c.l.b16 %v2180
        %v2219 = vunpack.c.l.b16 %v2181
        %v2220 = vunpack.c.l.b16 %v2182
        %v2221 = vunpack.c.l.b16 %v2183
        %v2222 = vunpack.c.l.b16 %v2184
        %v2223 = vunpack.c.l.b16 %v2185
        %v2224 = vunpack.c.l.b16 %v2186
        %v2225 = vunpack.c.l.b16 %v2187
        %v2226 = vunpack.c.l.b16 %v2188
        %v2227 = vunpack.c.l.b16 %v2189
        %v2228 = vunpack.c.l.b16 %v2190
        %v2229 = vunpack.c.l.b16 %v2191
        %v2230 = vpack.c.b16 %v2215, %v2214
        %v2231 = vpack.c.b16 %v2217, %v2216
        %v2232 = vpack.c.b16 %v2219, %v2218
        %v2233 = vpack.c.b16 %v2221, %v2220
        %v2234 = vpack.c.b16 %v2223, %v2222
        %v2235 = vpack.c.b16 %v2225, %v2224
        %v2236 = vpack.c.b16 %v2227, %v2226
        %v2237 = vpack.c.b16 %v2229, %v2228
        %2246 = vmatpush.bf16.msra.mxu0 %v2237
        %2247 = vmatpush.bf16.msra.mxu0 %v2236
        %2248 = vmatpush.bf16.msra.mxu0 %v2235
        %2249 = vmatpush.bf16.msra.mxu0 %v2234
        %2250 = vmatpush.bf16.msra.mxu0 %v2233
        %2251 = vmatpush.bf16.msra.mxu0 %v2232
        %2252 = vmatpush.bf16.msra.mxu0 %v2231
        %2253 = vmatpush.bf16.msra.mxu0 %v2230
        %2254 = vmatmul.bf16.gmra.mxu0 %v2196
        %v2255 = vpop.f32.mrf.mxu0
        %v2256 = vadd.f32 %v2193, %v2255
        %v2257 = vpop.f32.mrf.mxu0
        %v2258 = vadd.f32 %v2193, %v2257
        %2259 = vdwg.mxu0
        %v2260 = vadd.f32 %v1751, %v2256
        %v2261 = vadd.f32 %v1752, %v2258
        %v2262 = vpack.c.bf16 %v2260, %v2260
        %v2263 = vpack.c.bf16 %v2261, %v2261
        %s2264 = scalar_lea.vmem [#allocation7], 896
        %v2265 = vld [vmem:[%s2264] sm:$0xff]
        %v2266 = vld [vmem:[%s2264 + $0x8] sm:$0xff]
        %v2267 = vld [vmem:[%s2264 + $0x10] sm:$0xff]
        %v2268 = vld [vmem:[%s2264 + $0x18] sm:$0xff]
        %v2269 = vld [vmem:[%s2264 + $0x20] sm:$0xff]
        %v2270 = vld [vmem:[%s2264 + $0x28] sm:$0xff]
        %v2271 = vld [vmem:[%s2264 + $0x30] sm:$0xff]
        %v2272 = vld [vmem:[%s2264 + $0x38] sm:$0xff]
        %v2273 = vld [vmem:[%s2264 + $0x40] sm:$0xff]
        %v2274 = vld [vmem:[%s2264 + $0x48] sm:$0xff]
        %v2275 = vld [vmem:[%s2264 + $0x50] sm:$0xff]
        %v2276 = vld [vmem:[%s2264 + $0x58] sm:$0xff]
        %v2277 = vld [vmem:[%s2264 + $0x60] sm:$0xff]
        %v2278 = vld [vmem:[%s2264 + $0x68] sm:$0xff]
        %v2279 = vld [vmem:[%s2264 + $0x70] sm:$0xff]
        %v2280 = vld [vmem:[%s2264 + $0x78] sm:$0xff]
        %s2281 = scalar_lea.vmem [#allocation8], 3
        %v2282 = vld [vmem:[%s2281] ss:$4 sm:$0x3]
        %v2284 = vperm.slane %v2282, 0
        %v2285 = vperm.slane %v2282, 1
        %v2290 = vunpack.c.l.b16 %v2262
        %v2291 = vunpack.c.l.b16 %v2263
        %v2292 = vpack.c.b16 %v2291, %v2290
        %v2310 = vunpack.c.l.b16 %v2265
        %v2311 = vunpack.c.h.b16 %v2265
        %v2312 = vunpack.c.l.b16 %v2266
        %v2313 = vunpack.c.h.b16 %v2266
        %v2314 = vunpack.c.l.b16 %v2267
        %v2315 = vunpack.c.h.b16 %v2267
        %v2316 = vunpack.c.l.b16 %v2268
        %v2317 = vunpack.c.h.b16 %v2268
        %v2318 = vunpack.c.l.b16 %v2269
        %v2319 = vunpack.c.h.b16 %v2269
        %v2320 = vunpack.c.l.b16 %v2270
        %v2321 = vunpack.c.h.b16 %v2270
        %v2322 = vunpack.c.l.b16 %v2271
        %v2323 = vunpack.c.h.b16 %v2271
        %v2324 = vunpack.c.l.b16 %v2272
        %v2325 = vunpack.c.h.b16 %v2272
        %v2326 = vunpack.c.l.b16 %v2273
        %v2327 = vunpack.c.h.b16 %v2273
        %v2328 = vunpack.c.l.b16 %v2274
        %v2329 = vunpack.c.h.b16 %v2274
        %v2330 = vunpack.c.l.b16 %v2275
        %v2331 = vunpack.c.h.b16 %v2275
        %v2332 = vunpack.c.l.b16 %v2276
        %v2333 = vunpack.c.h.b16 %v2276
        %v2334 = vunpack.c.l.b16 %v2277
        %v2335 = vunpack.c.h.b16 %v2277
        %v2336 = vunpack.c.l.b16 %v2278
        %v2337 = vunpack.c.h.b16 %v2278
        %v2338 = vunpack.c.l.b16 %v2279
        %v2339 = vunpack.c.h.b16 %v2279
        %v2340 = vunpack.c.l.b16 %v2280
        %v2341 = vunpack.c.h.b16 %v2280
        %v2342 = vpack.c.b16 %v2312, %v2310
        %v2343 = vpack.c.b16 %v2313, %v2311
        %v2344 = vpack.c.b16 %v2316, %v2314
        %v2345 = vpack.c.b16 %v2317, %v2315
        %v2346 = vpack.c.b16 %v2320, %v2318
        %v2347 = vpack.c.b16 %v2321, %v2319
        %v2348 = vpack.c.b16 %v2324, %v2322
        %v2349 = vpack.c.b16 %v2325, %v2323
        %v2350 = vpack.c.b16 %v2328, %v2326
        %v2351 = vpack.c.b16 %v2329, %v2327
        %v2352 = vpack.c.b16 %v2332, %v2330
        %v2353 = vpack.c.b16 %v2333, %v2331
        %v2354 = vpack.c.b16 %v2336, %v2334
        %v2355 = vpack.c.b16 %v2337, %v2335
        %v2356 = vpack.c.b16 %v2340, %v2338
        %v2357 = vpack.c.b16 %v2341, %v2339
        %2374 = vmatpush.bf16.msra.mxu0 %v2356
        %2375 = vmatpush.bf16.msra.mxu0 %v2354
        %2376 = vmatpush.bf16.msra.mxu0 %v2352
        %2377 = vmatpush.bf16.msra.mxu0 %v2350
        %2378 = vmatpush.bf16.msra.mxu0 %v2348
        %2379 = vmatpush.bf16.msra.mxu0 %v2346
        %2380 = vmatpush.bf16.msra.mxu0 %v2344
        %2381 = vmatpush.bf16.msra.mxu0 %v2342
        %2382 = vmatmul.bf16.gmra.mxu0 %v2292
        %v2383 = vpop.f32.mrf.mxu0
        %v2384 = vpop.f32.mrf.mxu0
        %v2385 = vadd.f32 %v2284, %v2384
        %2386 = vdwg.mxu0
        %2387 = vmatpush.bf16.msra.mxu0 %v2357
        %2388 = vmatpush.bf16.msra.mxu0 %v2355
        %2389 = vmatpush.bf16.msra.mxu0 %v2353
        %2390 = vmatpush.bf16.msra.mxu0 %v2351
        %2391 = vmatpush.bf16.msra.mxu0 %v2349
        %2392 = vmatpush.bf16.msra.mxu0 %v2347
        %2393 = vmatpush.bf16.msra.mxu0 %v2345
        %2394 = vmatpush.bf16.msra.mxu0 %v2343
        %2395 = vmatmul.bf16.gmra.mxu0 %v2292
        %v2396 = vpop.f32.mrf.mxu0
        %v2397 = vpop.f32.mrf.mxu0
        %v2398 = vadd.f32 %v2285, %v2397
        %2399 = vdwg.mxu0
        %s2400 = scalar_lea.vmem [#allocation7], 768
        %v2401 = vld [vmem:[%s2400] sm:$0xff]
        %v2402 = vld [vmem:[%s2400 + $0x8] sm:$0xff]
        %v2403 = vld [vmem:[%s2400 + $0x10] sm:$0xff]
        %v2404 = vld [vmem:[%s2400 + $0x18] sm:$0xff]
        %v2405 = vld [vmem:[%s2400 + $0x20] sm:$0xff]
        %v2406 = vld [vmem:[%s2400 + $0x28] sm:$0xff]
        %v2407 = vld [vmem:[%s2400 + $0x30] sm:$0xff]
        %v2408 = vld [vmem:[%s2400 + $0x38] sm:$0xff]
        %v2409 = vld [vmem:[%s2400 + $0x40] sm:$0xff]
        %v2410 = vld [vmem:[%s2400 + $0x48] sm:$0xff]
        %v2411 = vld [vmem:[%s2400 + $0x50] sm:$0xff]
        %v2412 = vld [vmem:[%s2400 + $0x58] sm:$0xff]
        %v2413 = vld [vmem:[%s2400 + $0x60] sm:$0xff]
        %v2414 = vld [vmem:[%s2400 + $0x68] sm:$0xff]
        %v2415 = vld [vmem:[%s2400 + $0x70] sm:$0xff]
        %v2416 = vld [vmem:[%s2400 + $0x78] sm:$0xff]
        %v2433 = vunpack.c.l.b16 %v2401
        %v2434 = vunpack.c.h.b16 %v2401
        %v2435 = vunpack.c.l.b16 %v2402
        %v2436 = vunpack.c.h.b16 %v2402
        %v2437 = vunpack.c.l.b16 %v2403
        %v2438 = vunpack.c.h.b16 %v2403
        %v2439 = vunpack.c.l.b16 %v2404
        %v2440 = vunpack.c.h.b16 %v2404
        %v2441 = vunpack.c.l.b16 %v2405
        %v2442 = vunpack.c.h.b16 %v2405
        %v2443 = vunpack.c.l.b16 %v2406
        %v2444 = vunpack.c.h.b16 %v2406
        %v2445 = vunpack.c.l.b16 %v2407
        %v2446 = vunpack.c.h.b16 %v2407
        %v2447 = vunpack.c.l.b16 %v2408
        %v2448 = vunpack.c.h.b16 %v2408
        %v2449 = vunpack.c.l.b16 %v2409
        %v2450 = vunpack.c.h.b16 %v2409
        %v2451 = vunpack.c.l.b16 %v2410
        %v2452 = vunpack.c.h.b16 %v2410
        %v2453 = vunpack.c.l.b16 %v2411
        %v2454 = vunpack.c.h.b16 %v2411
        %v2455 = vunpack.c.l.b16 %v2412
        %v2456 = vunpack.c.h.b16 %v2412
        %v2457 = vunpack.c.l.b16 %v2413
        %v2458 = vunpack.c.h.b16 %v2413
        %v2459 = vunpack.c.l.b16 %v2414
        %v2460 = vunpack.c.h.b16 %v2414
        %v2461 = vunpack.c.l.b16 %v2415
        %v2462 = vunpack.c.h.b16 %v2415
        %v2463 = vunpack.c.l.b16 %v2416
        %v2464 = vunpack.c.h.b16 %v2416
        %v2465 = vpack.c.b16 %v2435, %v2433
        %v2466 = vpack.c.b16 %v2436, %v2434
        %v2467 = vpack.c.b16 %v2439, %v2437
        %v2468 = vpack.c.b16 %v2440, %v2438
        %v2469 = vpack.c.b16 %v2443, %v2441
        %v2470 = vpack.c.b16 %v2444, %v2442
        %v2471 = vpack.c.b16 %v2447, %v2445
        %v2472 = vpack.c.b16 %v2448, %v2446
        %v2473 = vpack.c.b16 %v2451, %v2449
        %v2474 = vpack.c.b16 %v2452, %v2450
        %v2475 = vpack.c.b16 %v2455, %v2453
        %v2476 = vpack.c.b16 %v2456, %v2454
        %v2477 = vpack.c.b16 %v2459, %v2457
        %v2478 = vpack.c.b16 %v2460, %v2458
        %v2479 = vpack.c.b16 %v2463, %v2461
        %v2480 = vpack.c.b16 %v2464, %v2462
        %2497 = vmatpush.bf16.msra.mxu0 %v2479
        %2498 = vmatpush.bf16.msra.mxu0 %v2477
        %2499 = vmatpush.bf16.msra.mxu0 %v2475
        %2500 = vmatpush.bf16.msra.mxu0 %v2473
        %2501 = vmatpush.bf16.msra.mxu0 %v2471
        %2502 = vmatpush.bf16.msra.mxu0 %v2469
        %2503 = vmatpush.bf16.msra.mxu0 %v2467
        %2504 = vmatpush.bf16.msra.mxu0 %v2465
        %2505 = vmatmul.bf16.gmra.mxu0 %v2292
        %v2506 = vpop.f32.mrf.mxu0
        %v2507 = vadd.f32 0.0, %v2506
        %v2508 = vpop.f32.mrf.mxu0
        %v2509 = vadd.f32 0.0, %v2508
        %2510 = vdwg.mxu0
        %2511 = vmatpush.bf16.msra.mxu0 %v2480
        %2512 = vmatpush.bf16.msra.mxu0 %v2478
        %2513 = vmatpush.bf16.msra.mxu0 %v2476
        %2514 = vmatpush.bf16.msra.mxu0 %v2474
        %2515 = vmatpush.bf16.msra.mxu0 %v2472
        %2516 = vmatpush.bf16.msra.mxu0 %v2470
        %2517 = vmatpush.bf16.msra.mxu0 %v2468
        %2518 = vmatpush.bf16.msra.mxu0 %v2466
        %2519 = vmatmul.bf16.gmra.mxu0 %v2292
        %v2520 = vpop.f32.mrf.mxu0
        %v2521 = vadd.f32 0.0, %v2520
        %v2522 = vpop.f32.mrf.mxu0
        %v2523 = vadd.f32 0.0, %v2522
        %2524 = vdwg.mxu0
        %v2529 = vrot.slane %v2507, 6
        %v2530 = vrot.slane %v2509, 6
        %v2531 = vsel %vm1512, %v2529, %v2530
        %v2532 = vrot.slane %v2521, 6
        %v2533 = vrot.slane %v2523, 6
        %v2534 = vsel %vm1512, %v2532, %v2533
        %v2537 = vadd.f32 %v2385, %v2531
        %v2538 = vadd.f32 %v2398, %v2534
        %v2539 = vtanh.pop %v2537
        %v2540 = vxor.u32 %v2538, 2147483648
        %v2541 = vmul.f32 %v2540, 1.442695
        %v2542 = vpow.pop %v2541
        %v2543 = vadd.f32 %v2542, 1.0
        %v2544 = vrcp.pop %v2543
        %v2545 = vmul.f32 %v2543, %v2544
        %v2546 = vsub.f32 1.0, %v2545
        %v2547 = vmul.f32 %v2544, %v2546
        %v2548 = vadd.f32 %v2544, %v2547
        %vm2549 = vweird.f32 %v2543
        %vm2550 = vweird.f32 %v2544
        %vm2551 = vmor %vm2549, %vm2550
        %v2552 = vsel %vm2551, %v2544, %v2548
        %v2553 = vand.u32 2147483647, %v2543
        %vm2554 = vcmp.eq.f32.partialorder %v2553, 8.507059e+37
        %v2555 = vand.u32 %v2543, 2147483648
        %v2556 = vor.u32 1.1754944e-38, %v2555
        %v2557 = vsel %vm2554, %v2556, %v2552
        %v2558 = vmul.f32 1.0, %v2557
        %v2559 = vmul.f32 %v2539, %v2558
        %v2560 = vpack.c.bf16 %v2559, %v2559
        %s2561 = scalar_lea.vmem [#allocation11], 192
        %v2562 = vld [vmem:[%s2561] sm:$0xf]
        %v2563 = vld [vmem:[%s2561 + $0x4] sm:$0xf]
        %v2564 = vld [vmem:[%s2561 + $0x8] sm:$0xf]
        %v2565 = vld [vmem:[%s2561 + $0xc] sm:$0xf]
        %v2566 = vld [vmem:[%s2561 + $0x10] sm:$0xf]
        %v2567 = vld [vmem:[%s2561 + $0x14] sm:$0xf]
        %v2568 = vld [vmem:[%s2561 + $0x18] sm:$0xf]
        %v2569 = vld [vmem:[%s2561 + $0x1c] sm:$0xf]
        %v2570 = vld [vmem:[%s2561 + $0x20] sm:$0xf]
        %v2571 = vld [vmem:[%s2561 + $0x24] sm:$0xf]
        %v2572 = vld [vmem:[%s2561 + $0x28] sm:$0xf]
        %v2573 = vld [vmem:[%s2561 + $0x2c] sm:$0xf]
        %v2574 = vld [vmem:[%s2561 + $0x30] sm:$0xf]
        %v2575 = vld [vmem:[%s2561 + $0x34] sm:$0xf]
        %v2576 = vld [vmem:[%s2561 + $0x38] sm:$0xf]
        %v2577 = vld [vmem:[%s2561 + $0x3c] sm:$0xf]
        %v2578 = vld [vmem:[#allocation13 + $0x3] sm:$0x1]
        %v2579 = vperm.slane %v2578, 0
        %v2581 = vunpack.c.l.b16 %v2560
        %v2582 = vpack.c.b16 %v2581, %v2581
        %v2584 = vshrl.u32 %v2582, 16
        %v2586 = vrot.slane %v2584, 1
        %v2587 = vshll.u32 %v2582, 16
        %v2589 = vrot.slane %v2587, 2
        %v2590 = vor.u32 %v2586, %v2589
        %v2608 = vunpack.c.l.b16 %v2562
        %v2609 = vunpack.c.l.b16 %v2563
        %v2610 = vunpack.c.l.b16 %v2564
        %v2611 = vunpack.c.l.b16 %v2565
        %v2612 = vunpack.c.l.b16 %v2566
        %v2613 = vunpack.c.l.b16 %v2567
        %v2614 = vunpack.c.l.b16 %v2568
        %v2615 = vunpack.c.l.b16 %v2569
        %v2616 = vunpack.c.l.b16 %v2570
        %v2617 = vunpack.c.l.b16 %v2571
        %v2618 = vunpack.c.l.b16 %v2572
        %v2619 = vunpack.c.l.b16 %v2573
        %v2620 = vunpack.c.l.b16 %v2574
        %v2621 = vunpack.c.l.b16 %v2575
        %v2622 = vunpack.c.l.b16 %v2576
        %v2623 = vunpack.c.l.b16 %v2577
        %v2624 = vpack.c.b16 %v2609, %v2608
        %v2625 = vpack.c.b16 %v2611, %v2610
        %v2626 = vpack.c.b16 %v2613, %v2612
        %v2627 = vpack.c.b16 %v2615, %v2614
        %v2628 = vpack.c.b16 %v2617, %v2616
        %v2629 = vpack.c.b16 %v2619, %v2618
        %v2630 = vpack.c.b16 %v2621, %v2620
        %v2631 = vpack.c.b16 %v2623, %v2622
        %2640 = vmatpush.bf16.msra.mxu0 %v2631
        %2641 = vmatpush.bf16.msra.mxu0 %v2630
        %2642 = vmatpush.bf16.msra.mxu0 %v2629
        %2643 = vmatpush.bf16.msra.mxu0 %v2628
        %2644 = vmatpush.bf16.msra.mxu0 %v2627
        %2645 = vmatpush.bf16.msra.mxu0 %v2626
        %2646 = vmatpush.bf16.msra.mxu0 %v2625
        %2647 = vmatpush.bf16.msra.mxu0 %v2624
        %2648 = vmatmul.bf16.gmra.mxu0 %v2590
        %v2649 = vpop.f32.mrf.mxu0
        %v2650 = vadd.f32 %v2579, %v2649
        %v2651 = vpop.f32.mrf.mxu0
        %2652 = vdwg.mxu0
        %v2653 = vadd.f32 %v2174, %v2650
        %v2654 = vpack.c.bf16 %v2653, %v2653
        %v2655 = vld [vmem:[#allocation14] sm:$0xf]
        %v2656 = vld [vmem:[#allocation14 + $0x4] sm:$0xf]
        %v2657 = vld [vmem:[#allocation14 + $0x8] sm:$0xf]
        %v2658 = vld [vmem:[#allocation14 + $0xc] sm:$0xf]
        %v2659 = vld [vmem:[#allocation14 + $0x10] sm:$0xf]
        %v2660 = vld [vmem:[#allocation14 + $0x14] sm:$0xf]
        %v2661 = vld [vmem:[#allocation14 + $0x18] sm:$0xf]
        %v2662 = vld [vmem:[#allocation14 + $0x1c] sm:$0xf]
        %v2663 = vld [vmem:[#allocation14 + $0x20] sm:$0xf]
        %v2664 = vld [vmem:[#allocation14 + $0x24] sm:$0xf]
        %v2665 = vld [vmem:[#allocation14 + $0x28] sm:$0xf]
        %v2666 = vld [vmem:[#allocation14 + $0x2c] sm:$0xf]
        %v2667 = vld [vmem:[#allocation14 + $0x30] sm:$0xf]
        %v2668 = vld [vmem:[#allocation14 + $0x34] sm:$0xf]
        %v2669 = vld [vmem:[#allocation14 + $0x38] sm:$0xf]
        %v2670 = vld [vmem:[#allocation14 + $0x3c] sm:$0xf]
        %v2671 = vld [vmem:[%s9] sm:$0x1]
        %v2673 = vperm.slane %v2671, 0
        %v2691 = vunpack.c.l.b16 %v2655
        %v2692 = vunpack.c.l.b16 %v2656
        %v2693 = vunpack.c.l.b16 %v2657
        %v2694 = vunpack.c.l.b16 %v2658
        %v2695 = vunpack.c.l.b16 %v2659
        %v2696 = vunpack.c.l.b16 %v2660
        %v2697 = vunpack.c.l.b16 %v2661
        %v2698 = vunpack.c.l.b16 %v2662
        %v2699 = vunpack.c.l.b16 %v2663
        %v2700 = vunpack.c.l.b16 %v2664
        %v2701 = vunpack.c.l.b16 %v2665
        %v2702 = vunpack.c.l.b16 %v2666
        %v2703 = vunpack.c.l.b16 %v2667
        %v2704 = vunpack.c.l.b16 %v2668
        %v2705 = vunpack.c.l.b16 %v2669
        %v2706 = vunpack.c.l.b16 %v2670
        %v2707 = vpack.c.b16 %v2692, %v2691
        %v2708 = vpack.c.b16 %v2694, %v2693
        %v2709 = vpack.c.b16 %v2696, %v2695
        %v2710 = vpack.c.b16 %v2698, %v2697
        %v2711 = vpack.c.b16 %v2700, %v2699
        %v2712 = vpack.c.b16 %v2702, %v2701
        %v2713 = vpack.c.b16 %v2704, %v2703
        %v2714 = vpack.c.b16 %v2706, %v2705
        %2723 = vmatpush.bf16.msra.mxu0 %v2714
        %2724 = vmatpush.bf16.msra.mxu0 %v2713
        %2725 = vmatpush.bf16.msra.mxu0 %v2712
        %2726 = vmatpush.bf16.msra.mxu0 %v2711
        %2727 = vmatpush.bf16.msra.mxu0 %v2710
        %2728 = vmatpush.bf16.msra.mxu0 %v2709
        %2729 = vmatpush.bf16.msra.mxu0 %v2708
        %2730 = vmatpush.bf16.msra.mxu0 %v2707
        %2731 = vmatmul.bf16.gmra.mxu0 %v2654
        %v2732 = vpop.f32.mrf.mxu0
        %v2733 = vadd.f32 %v2673, %v2732
        %v2734 = vpop.f32.mrf.mxu0
        %2735 = vdwg.mxu0
        %vm2736 = vcmp.gt.f32.partialorder %v2733, 0.0
        %v2737 = vmul.f32 %v2733, 0.01
        %v2738 = vsel %vm2736, %v2733, %v2737
        %v2739 = vpack.c.bf16 %v2738, %v2738
        %v2740 = vld [vmem:[#allocation16] sm:$0xf]
        %v2741 = vld [vmem:[#allocation16 + $0x4] sm:$0xf]
        %v2742 = vld [vmem:[#allocation16 + $0x8] sm:$0xf]
        %v2743 = vld [vmem:[#allocation16 + $0xc] sm:$0xf]
        %v2744 = vld [vmem:[#allocation16 + $0x10] sm:$0xf]
        %v2745 = vld [vmem:[#allocation16 + $0x14] sm:$0xf]
        %v2746 = vld [vmem:[#allocation16 + $0x18] sm:$0xf]
        %v2747 = vld [vmem:[#allocation16 + $0x1c] sm:$0xf]
        %v2748 = vld [vmem:[#allocation16 + $0x20] sm:$0xf]
        %v2749 = vld [vmem:[#allocation16 + $0x24] sm:$0xf]
        %v2750 = vld [vmem:[#allocation16 + $0x28] sm:$0xf]
        %v2751 = vld [vmem:[#allocation16 + $0x2c] sm:$0xf]
        %v2752 = vld [vmem:[#allocation16 + $0x30] sm:$0xf]
        %v2753 = vld [vmem:[#allocation16 + $0x34] sm:$0xf]
        %v2754 = vld [vmem:[#allocation16 + $0x38] sm:$0xf]
        %v2755 = vld [vmem:[#allocation16 + $0x3c] sm:$0xf]
        %v2756 = vld [vmem:[%s11] sm:$0x1]
        %v2758 = vperm.slane %v2756, 0
        %v2776 = vunpack.c.l.b16 %v2740
        %v2777 = vunpack.c.l.b16 %v2741
        %v2778 = vunpack.c.l.b16 %v2742
        %v2779 = vunpack.c.l.b16 %v2743
        %v2780 = vunpack.c.l.b16 %v2744
        %v2781 = vunpack.c.l.b16 %v2745
        %v2782 = vunpack.c.l.b16 %v2746
        %v2783 = vunpack.c.l.b16 %v2747
        %v2784 = vunpack.c.l.b16 %v2748
        %v2785 = vunpack.c.l.b16 %v2749
        %v2786 = vunpack.c.l.b16 %v2750
        %v2787 = vunpack.c.l.b16 %v2751
        %v2788 = vunpack.c.l.b16 %v2752
        %v2789 = vunpack.c.l.b16 %v2753
        %v2790 = vunpack.c.l.b16 %v2754
        %v2791 = vunpack.c.l.b16 %v2755
        %v2792 = vpack.c.b16 %v2777, %v2776
        %v2793 = vpack.c.b16 %v2779, %v2778
        %v2794 = vpack.c.b16 %v2781, %v2780
        %v2795 = vpack.c.b16 %v2783, %v2782
        %v2796 = vpack.c.b16 %v2785, %v2784
        %v2797 = vpack.c.b16 %v2787, %v2786
        %v2798 = vpack.c.b16 %v2789, %v2788
        %v2799 = vpack.c.b16 %v2791, %v2790
        %2808 = vmatpush.bf16.msra.mxu0 %v2799
        %2809 = vmatpush.bf16.msra.mxu0 %v2798
        %2810 = vmatpush.bf16.msra.mxu0 %v2797
        %2811 = vmatpush.bf16.msra.mxu0 %v2796
        %2812 = vmatpush.bf16.msra.mxu0 %v2795
        %2813 = vmatpush.bf16.msra.mxu0 %v2794
        %2814 = vmatpush.bf16.msra.mxu0 %v2793
        %2815 = vmatpush.bf16.msra.mxu0 %v2792
        %2816 = vmatmul.bf16.gmra.mxu0 %v2739
        %v2817 = vpop.f32.mrf.mxu0
        %v2818 = vadd.f32 %v2758, %v2817
        %v2819 = vpop.f32.mrf.mxu0
        %2820 = vdwg.mxu0
        %vm2821 = vcmp.gt.f32.partialorder %v2818, 0.0
        %v2822 = vmul.f32 %v2818, 0.01
        %v2823 = vsel %vm2821, %v2818, %v2822
        %2824 = vst [vmem:[%s561] sm:$0xf] %v2823
        %s2825 = sand.u32 %s298, 1
        %s2826 = scalar_lea.sflag [#allocation4], %s2825
        %s2827 = sand.u32 %s298, 1
        %s2828 = smul.addr %s2827, 4
        %s2829 = scalar_lea.vmem [#allocation17], %s2828
        // Predicated region
        $region105: #{tpu_custom_call.1} parent=67 // pred_check
          %p2830 = pneg %p308
        $region106: #{tpu_custom_call.1} parent=67 // pred_check_branch
          %2832 = sbr.rel (%p2830) target = $region108
        $region107: #{tpu_custom_call.1} parent=67 // pred_region
          %2834 = vsyncadd %s2826, 0
          %s2835 = smul.addr %s33, 4
          %s2836 = scalar_lea.hbm %s12, %s2835
          %s2838 = sshll.u32 %s2829, 4
          %s2839 = int_to_ptr.vmem [resolvable:$true] %s2838
          %s2840 = sshll.u32 %s2836, 4
          %s2841 = int_to_ptr.hbm [resolvable:$true] %s2840
          %2843 = dma.vmem_to_hbm [thread:$0]  %s2839, 64, %s2841, %s2826
        $region108: #{tpu_custom_call.1} parent=67 // pred_fallthru
          _
      $region68: #{tpu_custom_call.1} parent=5 // pred_fallthru
        _
      %p2844 = scmp.le.s32.totalorder 2, %s28
      // Predicated region
      $region109: #{tpu_custom_call.1} parent=5 // pred_check
        %p2845 = pneg %p2844
      $region110: #{tpu_custom_call.1} parent=5 // pred_check_branch
        %2847 = sbr.rel (%p2845) target = $region112
      $region111: #{tpu_custom_call.1} parent=5 // pred_region
        %s2848 = ssub.s32 %s28, 2
        // Predicated region
        $region113: #{tpu_custom_call.1} parent=111 // pred_check
          %p2849 = pneg %p314
        $region114: #{tpu_custom_call.1} parent=111 // pred_check_branch
          %2851 = sbr.rel (%p2849) target = $region116
        $region115: #{tpu_custom_call.1} parent=111 // pred_region
          %s2852 = sand.u32 %s299, 1
          %s2853 = scalar_lea.sflag [#allocation4], %s2852
          %s2854 = sand.u32 %s299, 1
          %s2855 = smul.addr %s2854, 4
          %s2856 = scalar_lea.vmem [#allocation17], %s2855
          %2858 = dma.done %s2853, 64
        $region116: #{tpu_custom_call.1} parent=111 // pred_fallthru
          _
      $region112: #{tpu_custom_call.1} parent=5 // pred_fallthru
        _
    $region6: #{tpu_custom_call.1} parent=1 // loop_footer
      %s32 = sadd.s32 1, %s28
    $region7: #{tpu_custom_call.1} parent=1 // loop_footer_branch
      %27 = sbr.rel target = $region3
    $region8: #{tpu_custom_call.1} parent=1 // loop_exit
      _
    %2859 = vsyncpa [#allocation3], 1
    %s2860 = scalar_lea.sflag [#allocation3], 1
    %2861 = vsyncpa %s2860, 1
    %2862 = vsyncpa [#allocation6], 1
    %2863 = vsyncpa [#allocation9], 1
    %2864 = vsyncpa [#allocation12], 1
    %2865 = vsyncpa [#allocation15], 1
    %2866 = vsyncpa [#allocation4], 1
    %s2867 = scalar_lea.sflag [#allocation4], 1
    %2868 = vsyncpa %s2867, 1

</llo_original>
